<compile_context>
chip_gen: v7x
topology: tpu7x:2x2x1
jax: 0.10.0
libtpu: 0.0.40
codegen_flags: <defaults>
</compile_context>

<pallas_src>
import math
import functools

import jax
import jax.numpy as jnp
from jax import lax
from jax.experimental import pallas as pl
from jax.experimental.pallas import tpu as pltpu


def _round_up(v: int, m: int) -> int:
    return (v + m - 1) // m * m


def _vit_attention_kernel(x_ref, wq_ref, bq_ref, wkv_ref, bkv_ref, wo_ref,
                          bo_ref, o_ref, k_scr, v_scr, *,
                          num_heads: int, hidden_size: int, q_tile: int,
                          n_valid: int):
    nh = num_heads
    H = hidden_size
    dh = H // nh
    n_pad = k_scr.shape[-1]
    cdt = k_scr.dtype                       # compute dtype for MXU feeds
    qi = pl.program_id(1)

    # ---- phase qi == 0 (once per batch element): fused K/V projection ----
    @pl.when(qi == 0)
    def _project_kv():
        x = x_ref[0]                                              # (n_pad, H)
        kv = jnp.dot(x, wkv_ref[...],
                     preferred_element_type=jnp.float32) + bkv_ref[...]
        # Heads-major, transposed (nh, dh, n_pad) scratch: lane-dense in the
        # sequence dim, clean per-head tiles in the hot path.  Per-head lane
        # slice + 2-D transpose here is paid once per batch in phase-0 slack.
        for h in range(nh):
            lo = h * dh
            k_scr[h] = kv[:, lo:lo + dh].astype(cdt).T            # (dh, n_pad)
            v_scr[h] = kv[:, H + lo:H + lo + dh].astype(cdt).T    # (dh, n_pad)

    # ---- per query-tile: Q projection + attention + output dense ----
    row0 = pl.multiple_of(qi * q_tile, q_tile)
    x_t = x_ref[0, pl.ds(row0, q_tile), :]                        # (tq, H)
    # 1/sqrt(H) already folded into wq/bq on the host.
    q = jnp.dot(x_t, wq_ref[...],
                preferred_element_type=jnp.float32) + bq_ref[...]  # (tq, H) f32

    masked = n_valid < n_pad                                      # static
    if masked:
        kmask = lax.broadcasted_iota(jnp.int32, (q_tile, n_pad), 1) < n_valid

    # Per-head attention: only one head's (tq, n_pad) f32 scores/exp are live
    # at a time (VMEM-friendly on v5e/v7x); the MXU work is identical to a
    # batched einsum (Mosaic unrolls the head dim anyway).
    ctx_parts = []
    for h in range(nh):
        lo = h * dh
        q_h = q[:, lo:lo + dh].astype(cdt)                        # (tq, dh)
        s_h = jnp.dot(q_h, k_scr[h],
                      preferred_element_type=jnp.float32)          # (tq, n_pad)
        if masked:
            s_h = jnp.where(kmask, s_h, jnp.float32(-1e30))
        m_h = jnp.max(s_h, axis=-1, keepdims=True)
        e_h = jnp.exp(s_h - m_h)
        # EUP approximate reciprocal (relaxes softmax accuracy to ~1e-3).
        p_h = e_h * pl.reciprocal(jnp.sum(e_h, axis=-1, keepdims=True),
                                  approx=True)
        # context: contract the sequence dim (last axis of both operands).
        ctx_parts.append(
            lax.dot_general(p_h.astype(cdt), v_scr[h],
                            dimension_numbers=(((1,), (1,)), ((), ())),
                            preferred_element_type=jnp.float32))   # (tq, dh)

    # Merge heads once per tile, then one full-depth (tq,H)@(H,H) MXU matmul.
    ctx = jnp.concatenate(ctx_parts, axis=-1)                      # (tq, H)
    out = jnp.dot(ctx.astype(wo_ref.dtype), wo_ref[...],
                  preferred_element_type=jnp.float32) + bo_ref[...]
    o_ref[0] = out.astype(o_ref.dtype)


def _vmem_bytes_estimate(n_pad, H, nh, dh, q_tile, itemsize):
    """Rough sum of padded resident buffers + live f32 temporaries."""
    def padded(shape, isz):
        s = list(shape)
        s[-1] = _round_up(s[-1], 128)
        if len(s) >= 2:
            s[-2] = _round_up(s[-2], 8)
        tot = 1
        for d in s:
            tot *= d
        return tot * isz

    est = 0
    est += 2 * padded((n_pad, H), itemsize)          # x block (double-buffered)
    est += 2 * padded((q_tile, H), itemsize)         # out block (double-buffered)
    for shp in ((H, H), (1, H), (H, 2 * H), (1, 2 * H), (H, H), (1, H)):
        est += padded(shp, itemsize)                 # single-buffered constants
    est += 2 * nh * padded((dh, n_pad), itemsize)    # K/V scratch
    phase0 = padded((n_pad, 2 * H), 4)               # fused KV projection temp
    tile = (2 * padded((q_tile, H), 4)               # q + out accumulators
            + 3 * padded((q_tile, n_pad), 4)         # one head's s/e/p
            + nh * padded((q_tile, dh), 4))          # ctx parts
    est += max(phase0, tile)
    return est


def _pick_vmem_limit(est_bytes):
    cap = 128 * 1024 * 1024
    try:
        cap = int(pltpu.get_tpu_info().vmem_capacity_bytes)
    except Exception:
        pass
    lo = 32 * 1024 * 1024
    hi = max(cap - 4 * 1024 * 1024, lo)
    return int(min(max(est_bytes * 3 // 2, lo), hi))


def vit_attention(x, params, *, num_heads: int, q_tile: int | None = None):
    """x: (B, N, H).  params: transposed weights (in,out) and biases (1,out)."""
    B, N, H = x.shape
    assert H % num_heads == 0, "hidden size must be divisible by num_heads"
    dh = H // num_heads

    # Query-tile selection; pad N so tiles are (8,128)-friendly.
    if q_tile is None:
        if N >= 512:
            q_tile = 256
        elif N >= 128:
            q_tile = 128
        else:
            q_tile = _round_up(N, 8)
    assert q_tile % 8 == 0
    n_pad = _round_up(N, q_tile)
    n_q = n_pad // q_tile
    x_in = x if n_pad == N else jnp.pad(x, ((0, 0), (0, n_pad - N), (0, 0)))

    # Host-side weight prep: fold 1/sqrt(H) into Q (PyTorch module scales by
    # 1/sqrt(hidden_size), NOT head_dim); fuse K/V into one (H, 2H) matmul.
    inv_scale = 1.0 / math.sqrt(float(H))
    wq_s = params["wq"] * inv_scale
    bq_s = params["bq"] * inv_scale
    wkv = jnp.concatenate([params["wk"], params["wv"]], axis=1)
    bkv = jnp.concatenate([params["bk"], params["bv"]], axis=1)

    kernel = functools.partial(
        _vit_attention_kernel,
        num_heads=num_heads, hidden_size=H, q_tile=q_tile, n_valid=N)

    const = lambda b, i: (0, 0)
    itemsize = jnp.dtype(x.dtype).itemsize
    vmem_limit = _pick_vmem_limit(
        _vmem_bytes_estimate(n_pad, H, num_heads, dh, q_tile, itemsize))

    out = pl.pallas_call(
        kernel,
        out_shape=jax.ShapeDtypeStruct((B, n_pad, H), x.dtype),
        grid_spec=pltpu.PrefetchScalarGridSpec(
            num_scalar_prefetch=0,
            grid=(B, n_q),
            in_specs=[
                # x: full (padded) sequence per batch element, DMA'd once per b.
                pl.BlockSpec((1, n_pad, H), lambda b, i: (b, 0, 0)),
                # Constants: DMA'd once; single-buffered to halve their VMEM.
                pl.BlockSpec((H, H), const, pipeline_mode=pl.Buffered(1)),      # W_q (scaled)
                pl.BlockSpec((1, H), const, pipeline_mode=pl.Buffered(1)),      # b_q (scaled)
                pl.BlockSpec((H, 2 * H), const, pipeline_mode=pl.Buffered(1)),  # W_kv
                pl.BlockSpec((1, 2 * H), const, pipeline_mode=pl.Buffered(1)),  # b_kv
                pl.BlockSpec((H, H), const, pipeline_mode=pl.Buffered(1)),      # W_o
                pl.BlockSpec((1, H), const, pipeline_mode=pl.Buffered(1)),      # b_o
            ],
            out_specs=pl.BlockSpec((1, q_tile, H), lambda b, i: (b, i, 0)),
            scratch_shapes=[
                pltpu.VMEM((num_heads, dh, n_pad), x.dtype),  # K, heads-major, transposed
                pltpu.VMEM((num_heads, dh, n_pad), x.dtype),  # V, heads-major, transposed
            ],
        ),
        compiler_params=pltpu.CompilerParams(
            # B is megacore-shardable; the query-tile axis reuses the K/V
            # scratch written at tile 0, so it must stay sequential.
            dimension_semantics=("parallel", "arbitrary"),
            vmem_limit_bytes=vmem_limit),
    )(x_in, wq_s, bq_s, wkv, bkv, params["wo"], params["bo"])

    return out if n_pad == N else out[:, :N, :]


def _reference(x, params, num_heads):
    """Plain-JAX reference mirroring the PyTorch forward exactly."""
    B, N, H = x.shape
    dh = H // num_heads

    def lin(t, w, b):  # w already transposed: (in, out)
        return t @ w + b

    q = lin(x, params["wq"], params["bq"]).reshape(B, N, num_heads, dh).transpose(0, 2, 1, 3)
    k = lin(x, params["wk"], params["bk"]).reshape(B, N, num_heads, dh).transpose(0, 2, 1, 3)
    v = lin(x, params["wv"], params["bv"]).reshape(B, N, num_heads, dh).transpose(0, 2, 1, 3)

    scores = jnp.einsum("bhqd,bhkd->bhqk", q, k) / math.sqrt(float(H))
    probs = jax.nn.softmax(scores, axis=-1)
    ctx = jnp.einsum("bhqk,bhkd->bhqd", probs, v)
    ctx = ctx.transpose(0, 2, 1, 3).reshape(B, N, H)
    return lin(ctx, params["wo"], params["bo"])


if __name__ == "__main__":
    B, N, H, num_heads = 2, 8, 32, 4

    key = jax.random.PRNGKey(0)
    keys = jax.random.split(key, 10)

    # PyTorch nn.Linear has W (out, in), b (out,).  We store W transposed ->
    # (in, out) and biases as (1, out) for clean TPU tiling.
    def make_linear(kw, kb):
        w = jax.random.normal(kw, (H, H), dtype=jnp.float32) * 0.05
        b = jax.random.normal(kb, (1, H), dtype=jnp.float32) * 0.05
        return w, b

    wq, bq = make_linear(keys[0], keys[1])
    wk, bk = make_linear(keys[2], keys[3])
    wv, bv = make_linear(keys[4], keys[5])
    wo, bo = make_linear(keys[6], keys[7])
    params = dict(wq=wq, bq=bq, wk=wk, bk=bk, wv=wv, bv=bv, wo=wo, bo=bo)

    # Test 1: aligned shapes (no padding), single query tile per batch element.
    x = jax.random.normal(keys[8], (B, N, H), dtype=jnp.float32)
    out = jax.block_until_ready(vit_attention(x, params, num_heads=num_heads))
    ref = _reference(x, params, num_heads)
    assert out.shape == (B, N, H)
    # Tolerance 2e-3: the softmax uses the EUP approximate reciprocal and the
    # 1/sqrt(H) scale is folded into the Q weights.
    assert jnp.allclose(out, ref, atol=2e-3, rtol=2e-3), "mismatch vs reference (test 1)"

    # Test 2: N not a multiple of the tile -> exercises padding, key masking
    # and multiple query tiles (n_pad=24, q_tile=8, n_q=3).
    N2 = 20
    x2 = jax.random.normal(keys[9], (1, N2, H), dtype=jnp.float32)
    out2 = jax.block_until_ready(
        vit_attention(x2, params, num_heads=num_heads, q_tile=8))
    ref2 = _reference(x2, params, num_heads)
    assert out2.shape == (1, N2, H)
    assert jnp.allclose(out2, ref2, atol=2e-3, rtol=2e-3), "mismatch vs reference (test 2)"

    print("KERNEL_OK")
</pallas_src>

<mosaic_0001>
module attributes {stable_mosaic.version = 11 : i64} {
  func.func @_vit_attention_kernel(%arg0: i32, %arg1: i32, %arg2: memref<1x8x32xf32, #tpu.memory_space<vmem>>, %arg3: memref<32x32xf32, #tpu.memory_space<vmem>>, %arg4: memref<1x32xf32, #tpu.memory_space<vmem>>, %arg5: memref<32x64xf32, #tpu.memory_space<vmem>>, %arg6: memref<1x64xf32, #tpu.memory_space<vmem>>, %arg7: memref<32x32xf32, #tpu.memory_space<vmem>>, %arg8: memref<1x32xf32, #tpu.memory_space<vmem>>, %arg9: memref<1x8x32xf32, #tpu.memory_space<vmem>>, %arg10: memref<4x8x8xf32, #tpu.memory_space<vmem>>, %arg11: memref<4x8x8xf32, #tpu.memory_space<vmem>>) attributes {dimension_semantics = [#tpu.dimension_semantics<parallel>, #tpu.dimension_semantics<arbitrary>], iteration_bounds = array<i64: 2, 1>, scalar_prefetch = 0 : i64, scratch_operands = 2 : i64, tpu.core_type = #tpu.core_type<tc>, window_params = [{transform_indices = @transform_0, window_bounds = array<i64: 1, 8, 32>}, {pipeline_mode = #tpu.pipeline_mode<synchronous>, transform_indices = @transform_1, window_bounds = array<i64: 32, 32>}, {pipeline_mode = #tpu.pipeline_mode<synchronous>, transform_indices = @transform_2, window_bounds = array<i64: 1, 32>}, {pipeline_mode = #tpu.pipeline_mode<synchronous>, transform_indices = @transform_3, window_bounds = array<i64: 32, 64>}, {pipeline_mode = #tpu.pipeline_mode<synchronous>, transform_indices = @transform_4, window_bounds = array<i64: 1, 64>}, {pipeline_mode = #tpu.pipeline_mode<synchronous>, transform_indices = @transform_5, window_bounds = array<i64: 32, 32>}, {pipeline_mode = #tpu.pipeline_mode<synchronous>, transform_indices = @transform_6, window_bounds = array<i64: 1, 32>}, {transform_indices = @transform_7, window_bounds = array<i64: 1, 8, 32>}]} {
    %c0_i32 = arith.constant 0 : i32
    %0 = arith.cmpi eq, %arg1, %c0_i32 : i32
    %1 = arith.extui %0 : i1 to i32
    %c0_i32_0 = arith.constant 0 : i32
    %2 = arith.cmpi ne, %1, %c0_i32_0 : i32
    scf.if %2 {
      %c0_51 = arith.constant 0 : index
      %c0_52 = arith.constant 0 : index
      %c0_53 = arith.constant 0 : index
      %90 = vector.load %arg2[%c0_51, %c0_52, %c0_53] : memref<1x8x32xf32, #tpu.memory_space<vmem>>, vector<1x8x32xf32>
      %91 = vector.shape_cast %90 : vector<1x8x32xf32> to vector<8x32xf32>
      %c0_54 = arith.constant 0 : index
      %c0_55 = arith.constant 0 : index
      %92 = vector.load %arg5[%c0_54, %c0_55] : memref<32x64xf32, #tpu.memory_space<vmem>>, vector<32x64xf32>
      %cst_56 = arith.constant dense<0.000000e+00> : vector<8x64xf32>
      %93 = tpu.matmul %91, %92, %cst_56 {dimension_numbers = #tpu.dot_dimension_numbers<[1], [0], [0], [1], [0, 0, 1, 1], [], []>} : vector<8x32xf32>, vector<32x64xf32>, vector<8x64xf32> -> vector<8x64xf32>
      %c0_57 = arith.constant 0 : index
      %c0_58 = arith.constant 0 : index
      %94 = vector.load %arg6[%c0_57, %c0_58] : memref<1x64xf32, #tpu.memory_space<vmem>>, vector<1x64xf32>
      %95 = vector.broadcast %94 : vector<1x64xf32> to vector<8x64xf32>
      %96 = arith.addf %93, %95 : vector<8x64xf32>
      %97 = vector.extract_strided_slice %96 {offsets = [0, 0], sizes = [8, 8], strides = [1, 1]} : vector<8x64xf32> to vector<8x8xf32>
      %98 = tpu.transpose %97, [1, 0] : vector<8x8xf32> -> vector<8x8xf32>
      %c0_59 = arith.constant 0 : index
      %c0_60 = arith.constant 0 : index
      %c0_61 = arith.constant 0 : index
      %99 = vector.load %arg10[%c0_59, %c0_60, %c0_61] : memref<4x8x8xf32, #tpu.memory_space<vmem>>, vector<1x8x8xf32>
      %100 = vector.shape_cast %99 : vector<1x8x8xf32> to vector<8x8xf32>
      %101 = vector.shape_cast %98 : vector<8x8xf32> to vector<1x8x8xf32>
      tpu.vector_store %arg10[%c0_59, %c0_60, %c0_61], %101 {strides = array<i32>} : memref<4x8x8xf32, #tpu.memory_space<vmem>>, vector<1x8x8xf32>,
      %102 = vector.extract_strided_slice %96 {offsets = [0, 32], sizes = [8, 8], strides = [1, 1]} : vector<8x64xf32> to vector<8x8xf32>
      %103 = tpu.transpose %102, [1, 0] : vector<8x8xf32> -> vector<8x8xf32>
      %c0_62 = arith.constant 0 : index
      %c0_63 = arith.constant 0 : index
      %c0_64 = arith.constant 0 : index
      %104 = vector.load %arg11[%c0_62, %c0_63, %c0_64] : memref<4x8x8xf32, #tpu.memory_space<vmem>>, vector<1x8x8xf32>
      %105 = vector.shape_cast %104 : vector<1x8x8xf32> to vector<8x8xf32>
      %106 = vector.shape_cast %103 : vector<8x8xf32> to vector<1x8x8xf32>
      tpu.vector_store %arg11[%c0_62, %c0_63, %c0_64], %106 {strides = array<i32>} : memref<4x8x8xf32, #tpu.memory_space<vmem>>, vector<1x8x8xf32>,
      %107 = vector.extract_strided_slice %96 {offsets = [0, 8], sizes = [8, 8], strides = [1, 1]} : vector<8x64xf32> to vector<8x8xf32>
      %108 = tpu.transpose %107, [1, 0] : vector<8x8xf32> -> vector<8x8xf32>
      %c1_65 = arith.constant 1 : index
      %c0_66 = arith.constant 0 : index
      %c0_67 = arith.constant 0 : index
      %109 = vector.load %arg10[%c1_65, %c0_66, %c0_67] : memref<4x8x8xf32, #tpu.memory_space<vmem>>, vector<1x8x8xf32>
      %110 = vector.shape_cast %109 : vector<1x8x8xf32> to vector<8x8xf32>
      %111 = vector.shape_cast %108 : vector<8x8xf32> to vector<1x8x8xf32>
      tpu.vector_store %arg10[%c1_65, %c0_66, %c0_67], %111 {strides = array<i32>} : memref<4x8x8xf32, #tpu.memory_space<vmem>>, vector<1x8x8xf32>,
      %112 = vector.extract_strided_slice %96 {offsets = [0, 40], sizes = [8, 8], strides = [1, 1]} : vector<8x64xf32> to vector<8x8xf32>
      %113 = tpu.transpose %112, [1, 0] : vector<8x8xf32> -> vector<8x8xf32>
      %c1_68 = arith.constant 1 : index
      %c0_69 = arith.constant 0 : index
      %c0_70 = arith.constant 0 : index
      %114 = vector.load %arg11[%c1_68, %c0_69, %c0_70] : memref<4x8x8xf32, #tpu.memory_space<vmem>>, vector<1x8x8xf32>
      %115 = vector.shape_cast %114 : vector<1x8x8xf32> to vector<8x8xf32>
      %116 = vector.shape_cast %113 : vector<8x8xf32> to vector<1x8x8xf32>
      tpu.vector_store %arg11[%c1_68, %c0_69, %c0_70], %116 {strides = array<i32>} : memref<4x8x8xf32, #tpu.memory_space<vmem>>, vector<1x8x8xf32>,
      %117 = vector.extract_strided_slice %96 {offsets = [0, 16], sizes = [8, 8], strides = [1, 1]} : vector<8x64xf32> to vector<8x8xf32>
      %118 = tpu.transpose %117, [1, 0] : vector<8x8xf32> -> vector<8x8xf32>
      %c2_71 = arith.constant 2 : index
      %c0_72 = arith.constant 0 : index
      %c0_73 = arith.constant 0 : index
      %119 = vector.load %arg10[%c2_71, %c0_72, %c0_73] : memref<4x8x8xf32, #tpu.memory_space<vmem>>, vector<1x8x8xf32>
      %120 = vector.shape_cast %119 : vector<1x8x8xf32> to vector<8x8xf32>
      %121 = vector.shape_cast %118 : vector<8x8xf32> to vector<1x8x8xf32>
      tpu.vector_store %arg10[%c2_71, %c0_72, %c0_73], %121 {strides = array<i32>} : memref<4x8x8xf32, #tpu.memory_space<vmem>>, vector<1x8x8xf32>,
      %122 = vector.extract_strided_slice %96 {offsets = [0, 48], sizes = [8, 8], strides = [1, 1]} : vector<8x64xf32> to vector<8x8xf32>
      %123 = tpu.transpose %122, [1, 0] : vector<8x8xf32> -> vector<8x8xf32>
      %c2_74 = arith.constant 2 : index
      %c0_75 = arith.constant 0 : index
      %c0_76 = arith.constant 0 : index
      %124 = vector.load %arg11[%c2_74, %c0_75, %c0_76] : memref<4x8x8xf32, #tpu.memory_space<vmem>>, vector<1x8x8xf32>
      %125 = vector.shape_cast %124 : vector<1x8x8xf32> to vector<8x8xf32>
      %126 = vector.shape_cast %123 : vector<8x8xf32> to vector<1x8x8xf32>
      tpu.vector_store %arg11[%c2_74, %c0_75, %c0_76], %126 {strides = array<i32>} : memref<4x8x8xf32, #tpu.memory_space<vmem>>, vector<1x8x8xf32>,
      %127 = vector.extract_strided_slice %96 {offsets = [0, 24], sizes = [8, 8], strides = [1, 1]} : vector<8x64xf32> to vector<8x8xf32>
      %128 = tpu.transpose %127, [1, 0] : vector<8x8xf32> -> vector<8x8xf32>
      %c3_77 = arith.constant 3 : index
      %c0_78 = arith.constant 0 : index
      %c0_79 = arith.constant 0 : index
      %129 = vector.load %arg10[%c3_77, %c0_78, %c0_79] : memref<4x8x8xf32, #tpu.memory_space<vmem>>, vector<1x8x8xf32>
      %130 = vector.shape_cast %129 : vector<1x8x8xf32> to vector<8x8xf32>
      %131 = vector.shape_cast %128 : vector<8x8xf32> to vector<1x8x8xf32>
      tpu.vector_store %arg10[%c3_77, %c0_78, %c0_79], %131 {strides = array<i32>} : memref<4x8x8xf32, #tpu.memory_space<vmem>>, vector<1x8x8xf32>,
      %132 = vector.extract_strided_slice %96 {offsets = [0, 56], sizes = [8, 8], strides = [1, 1]} : vector<8x64xf32> to vector<8x8xf32>
      %133 = tpu.transpose %132, [1, 0] : vector<8x8xf32> -> vector<8x8xf32>
      %c3_80 = arith.constant 3 : index
      %c0_81 = arith.constant 0 : index
      %c0_82 = arith.constant 0 : index
      %134 = vector.load %arg11[%c3_80, %c0_81, %c0_82] : memref<4x8x8xf32, #tpu.memory_space<vmem>>, vector<1x8x8xf32>
      %135 = vector.shape_cast %134 : vector<1x8x8xf32> to vector<8x8xf32>
      %136 = vector.shape_cast %133 : vector<8x8xf32> to vector<1x8x8xf32>
      tpu.vector_store %arg11[%c3_80, %c0_81, %c0_82], %136 {strides = array<i32>} : memref<4x8x8xf32, #tpu.memory_space<vmem>>, vector<1x8x8xf32>,
    } else {
    }
    %c8_i32 = arith.constant 8 : i32
    %3 = arith.muli %arg1, %c8_i32 : i32
    %4 = tpu.assume_multiple %3, 8 : i32
    %c0 = arith.constant 0 : index
    %5 = arith.index_cast %4 : i32 to index
    %c0_1 = arith.constant 0 : index
    %6 = vector.load %arg2[%c0, %5, %c0_1] : memref<1x8x32xf32, #tpu.memory_space<vmem>>, vector<1x8x32xf32>
    %7 = vector.shape_cast %6 : vector<1x8x32xf32> to vector<8x32xf32>
    %c0_2 = arith.constant 0 : index
    %c0_3 = arith.constant 0 : index
    %8 = vector.load %arg3[%c0_2, %c0_3] : memref<32x32xf32, #tpu.memory_space<vmem>>, vector<32x32xf32>
    %cst = arith.constant dense<0.000000e+00> : vector<8x32xf32>
    %9 = tpu.matmul %7, %8, %cst {dimension_numbers = #tpu.dot_dimension_numbers<[1], [0], [0], [1], [0, 0, 1, 1], [], []>} : vector<8x32xf32>, vector<32x32xf32>, vector<8x32xf32> -> vector<8x32xf32>
    %c0_4 = arith.constant 0 : index
    %c0_5 = arith.constant 0 : index
    %10 = vector.load %arg4[%c0_4, %c0_5] : memref<1x32xf32, #tpu.memory_space<vmem>>, vector<1x32xf32>
    %11 = vector.broadcast %10 : vector<1x32xf32> to vector<8x32xf32>
    %12 = arith.addf %9, %11 : vector<8x32xf32>
    %13 = vector.extract_strided_slice %12 {offsets = [0, 0], sizes = [8, 8], strides = [1, 1]} : vector<8x32xf32> to vector<8x8xf32>
    %c0_6 = arith.constant 0 : index
    %c0_7 = arith.constant 0 : index
    %c0_8 = arith.constant 0 : index
    %14 = vector.load %arg10[%c0_6, %c0_7, %c0_8] : memref<4x8x8xf32, #tpu.memory_space<vmem>>, vector<1x8x8xf32>
    %15 = vector.shape_cast %14 : vector<1x8x8xf32> to vector<8x8xf32>
    %cst_9 = arith.constant dense<0.000000e+00> : vector<8x8xf32>
    %16 = tpu.matmul %13, %15, %cst_9 {dimension_numbers = #tpu.dot_dimension_numbers<[1], [0], [0], [1], [0, 0, 1, 1], [], []>} : vector<8x8xf32>, vector<8x8xf32>, vector<8x8xf32> -> vector<8x8xf32>
    %cst_10 = arith.constant dense<0xFF800000> : vector<8xf32>
    %17 = vector.multi_reduction <maximumf>, %16, %cst_10 [1] : vector<8x8xf32> to vector<8xf32>
    %18 = vector.shape_cast %17 : vector<8xf32> to vector<8x1xf32>
    %19 = vector.broadcast %18 : vector<8x1xf32> to vector<8x8xf32>
    %20 = arith.subf %16, %19 : vector<8x8xf32>
    %21 = math.exp %20 : vector<8x8xf32>
    %cst_11 = arith.constant dense<0.000000e+00> : vector<8xf32>
    %22 = vector.multi_reduction <add>, %21, %cst_11 [1] : vector<8x8xf32> to vector<8xf32>
    %23 = vector.shape_cast %22 : vector<8xf32> to vector<8x1xf32>
    %24 = tpu.reciprocal %23 {approx = true} : vector<8x1xf32> -> vector<8x1xf32>
    %25 = vector.broadcast %24 : vector<8x1xf32> to vector<8x8xf32>
    %26 = arith.mulf %21, %25 : vector<8x8xf32>
    %c0_12 = arith.constant 0 : index
    %c0_13 = arith.constant 0 : index
    %c0_14 = arith.constant 0 : index
    %27 = vector.load %arg11[%c0_12, %c0_13, %c0_14] : memref<4x8x8xf32, #tpu.memory_space<vmem>>, vector<1x8x8xf32>
    %28 = vector.shape_cast %27 : vector<1x8x8xf32> to vector<8x8xf32>
    %cst_15 = arith.constant dense<0.000000e+00> : vector<8x8xf32>
    %29 = tpu.matmul %26, %28, %cst_15 {dimension_numbers = #tpu.dot_dimension_numbers<[1], [1], [0], [0], [0, 0, 1, 0], [], []>} : vector<8x8xf32>, vector<8x8xf32>, vector<8x8xf32> -> vector<8x8xf32>
    %30 = vector.extract_strided_slice %12 {offsets = [0, 8], sizes = [8, 8], strides = [1, 1]} : vector<8x32xf32> to vector<8x8xf32>
    %c1 = arith.constant 1 : index
    %c0_16 = arith.constant 0 : index
    %c0_17 = arith.constant 0 : index
    %31 = vector.load %arg10[%c1, %c0_16, %c0_17] : memref<4x8x8xf32, #tpu.memory_space<vmem>>, vector<1x8x8xf32>
    %32 = vector.shape_cast %31 : vector<1x8x8xf32> to vector<8x8xf32>
    %cst_18 = arith.constant dense<0.000000e+00> : vector<8x8xf32>
    %33 = tpu.matmul %30, %32, %cst_18 {dimension_numbers = #tpu.dot_dimension_numbers<[1], [0], [0], [1], [0, 0, 1, 1], [], []>} : vector<8x8xf32>, vector<8x8xf32>, vector<8x8xf32> -> vector<8x8xf32>
    %cst_19 = arith.constant dense<0xFF800000> : vector<8xf32>
    %34 = vector.multi_reduction <maximumf>, %33, %cst_19 [1] : vector<8x8xf32> to vector<8xf32>
    %35 = vector.shape_cast %34 : vector<8xf32> to vector<8x1xf32>
    %36 = vector.broadcast %35 : vector<8x1xf32> to vector<8x8xf32>
    %37 = arith.subf %33, %36 : vector<8x8xf32>
    %38 = math.exp %37 : vector<8x8xf32>
    %cst_20 = arith.constant dense<0.000000e+00> : vector<8xf32>
    %39 = vector.multi_reduction <add>, %38, %cst_20 [1] : vector<8x8xf32> to vector<8xf32>
    %40 = vector.shape_cast %39 : vector<8xf32> to vector<8x1xf32>
    %41 = tpu.reciprocal %40 {approx = true} : vector<8x1xf32> -> vector<8x1xf32>
    %42 = vector.broadcast %41 : vector<8x1xf32> to vector<8x8xf32>
    %43 = arith.mulf %38, %42 : vector<8x8xf32>
    %c1_21 = arith.constant 1 : index
    %c0_22 = arith.constant 0 : index
    %c0_23 = arith.constant 0 : index
    %44 = vector.load %arg11[%c1_21, %c0_22, %c0_23] : memref<4x8x8xf32, #tpu.memory_space<vmem>>, vector<1x8x8xf32>
    %45 = vector.shape_cast %44 : vector<1x8x8xf32> to vector<8x8xf32>
    %cst_24 = arith.constant dense<0.000000e+00> : vector<8x8xf32>
    %46 = tpu.matmul %43, %45, %cst_24 {dimension_numbers = #tpu.dot_dimension_numbers<[1], [1], [0], [0], [0, 0, 1, 0], [], []>} : vector<8x8xf32>, vector<8x8xf32>, vector<8x8xf32> -> vector<8x8xf32>
    %47 = vector.extract_strided_slice %12 {offsets = [0, 16], sizes = [8, 8], strides = [1, 1]} : vector<8x32xf32> to vector<8x8xf32>
    %c2 = arith.constant 2 : index
    %c0_25 = arith.constant 0 : index
    %c0_26 = arith.constant 0 : index
    %48 = vector.load %arg10[%c2, %c0_25, %c0_26] : memref<4x8x8xf32, #tpu.memory_space<vmem>>, vector<1x8x8xf32>
    %49 = vector.shape_cast %48 : vector<1x8x8xf32> to vector<8x8xf32>
    %cst_27 = arith.constant dense<0.000000e+00> : vector<8x8xf32>
    %50 = tpu.matmul %47, %49, %cst_27 {dimension_numbers = #tpu.dot_dimension_numbers<[1], [0], [0], [1], [0, 0, 1, 1], [], []>} : vector<8x8xf32>, vector<8x8xf32>, vector<8x8xf32> -> vector<8x8xf32>
    %cst_28 = arith.constant dense<0xFF800000> : vector<8xf32>
    %51 = vector.multi_reduction <maximumf>, %50, %cst_28 [1] : vector<8x8xf32> to vector<8xf32>
    %52 = vector.shape_cast %51 : vector<8xf32> to vector<8x1xf32>
    %53 = vector.broadcast %52 : vector<8x1xf32> to vector<8x8xf32>
    %54 = arith.subf %50, %53 : vector<8x8xf32>
    %55 = math.exp %54 : vector<8x8xf32>
    %cst_29 = arith.constant dense<0.000000e+00> : vector<8xf32>
    %56 = vector.multi_reduction <add>, %55, %cst_29 [1] : vector<8x8xf32> to vector<8xf32>
    %57 = vector.shape_cast %56 : vector<8xf32> to vector<8x1xf32>
    %58 = tpu.reciprocal %57 {approx = true} : vector<8x1xf32> -> vector<8x1xf32>
    %59 = vector.broadcast %58 : vector<8x1xf32> to vector<8x8xf32>
    %60 = arith.mulf %55, %59 : vector<8x8xf32>
    %c2_30 = arith.constant 2 : index
    %c0_31 = arith.constant 0 : index
    %c0_32 = arith.constant 0 : index
    %61 = vector.load %arg11[%c2_30, %c0_31, %c0_32] : memref<4x8x8xf32, #tpu.memory_space<vmem>>, vector<1x8x8xf32>
    %62 = vector.shape_cast %61 : vector<1x8x8xf32> to vector<8x8xf32>
    %cst_33 = arith.constant dense<0.000000e+00> : vector<8x8xf32>
    %63 = tpu.matmul %60, %62, %cst_33 {dimension_numbers = #tpu.dot_dimension_numbers<[1], [1], [0], [0], [0, 0, 1, 0], [], []>} : vector<8x8xf32>, vector<8x8xf32>, vector<8x8xf32> -> vector<8x8xf32>
    %64 = vector.extract_strided_slice %12 {offsets = [0, 24], sizes = [8, 8], strides = [1, 1]} : vector<8x32xf32> to vector<8x8xf32>
    %c3 = arith.constant 3 : index
    %c0_34 = arith.constant 0 : index
    %c0_35 = arith.constant 0 : index
    %65 = vector.load %arg10[%c3, %c0_34, %c0_35] : memref<4x8x8xf32, #tpu.memory_space<vmem>>, vector<1x8x8xf32>
    %66 = vector.shape_cast %65 : vector<1x8x8xf32> to vector<8x8xf32>
    %cst_36 = arith.constant dense<0.000000e+00> : vector<8x8xf32>
    %67 = tpu.matmul %64, %66, %cst_36 {dimension_numbers = #tpu.dot_dimension_numbers<[1], [0], [0], [1], [0, 0, 1, 1], [], []>} : vector<8x8xf32>, vector<8x8xf32>, vector<8x8xf32> -> vector<8x8xf32>
    %cst_37 = arith.constant dense<0xFF800000> : vector<8xf32>
    %68 = vector.multi_reduction <maximumf>, %67, %cst_37 [1] : vector<8x8xf32> to vector<8xf32>
    %69 = vector.shape_cast %68 : vector<8xf32> to vector<8x1xf32>
    %70 = vector.broadcast %69 : vector<8x1xf32> to vector<8x8xf32>
    %71 = arith.subf %67, %70 : vector<8x8xf32>
    %72 = math.exp %71 : vector<8x8xf32>
    %cst_38 = arith.constant dense<0.000000e+00> : vector<8xf32>
    %73 = vector.multi_reduction <add>, %72, %cst_38 [1] : vector<8x8xf32> to vector<8xf32>
    %74 = vector.shape_cast %73 : vector<8xf32> to vector<8x1xf32>
    %75 = tpu.reciprocal %74 {approx = true} : vector<8x1xf32> -> vector<8x1xf32>
    %76 = vector.broadcast %75 : vector<8x1xf32> to vector<8x8xf32>
    %77 = arith.mulf %72, %76 : vector<8x8xf32>
    %c3_39 = arith.constant 3 : index
    %c0_40 = arith.constant 0 : index
    %c0_41 = arith.constant 0 : index
    %78 = vector.load %arg11[%c3_39, %c0_40, %c0_41] : memref<4x8x8xf32, #tpu.memory_space<vmem>>, vector<1x8x8xf32>
    %79 = vector.shape_cast %78 : vector<1x8x8xf32> to vector<8x8xf32>
    %cst_42 = arith.constant dense<0.000000e+00> : vector<8x8xf32>
    %80 = tpu.matmul %77, %79, %cst_42 {dimension_numbers = #tpu.dot_dimension_numbers<[1], [1], [0], [0], [0, 0, 1, 0], [], []>} : vector<8x8xf32>, vector<8x8xf32>, vector<8x8xf32> -> vector<8x8xf32>
    %81 = tpu.concatenate %29, %46, %63, %80 in 1 : vector<8x8xf32>, vector<8x8xf32>, vector<8x8xf32>, vector<8x8xf32> -> vector<8x32xf32>
    %c0_43 = arith.constant 0 : index
    %c0_44 = arith.constant 0 : index
    %82 = vector.load %arg7[%c0_43, %c0_44] : memref<32x32xf32, #tpu.memory_space<vmem>>, vector<32x32xf32>
    %cst_45 = arith.constant dense<0.000000e+00> : vector<8x32xf32>
    %83 = tpu.matmul %81, %82, %cst_45 {dimension_numbers = #tpu.dot_dimension_numbers<[1], [0], [0], [1], [0, 0, 1, 1], [], []>} : vector<8x32xf32>, vector<32x32xf32>, vector<8x32xf32> -> vector<8x32xf32>
    %c0_46 = arith.constant 0 : index
    %c0_47 = arith.constant 0 : index
    %84 = vector.load %arg8[%c0_46, %c0_47] : memref<1x32xf32, #tpu.memory_space<vmem>>, vector<1x32xf32>
    %85 = vector.broadcast %84 : vector<1x32xf32> to vector<8x32xf32>
    %86 = arith.addf %83, %85 : vector<8x32xf32>
    %c0_48 = arith.constant 0 : index
    %c0_49 = arith.constant 0 : index
    %c0_50 = arith.constant 0 : index
    %87 = vector.load %arg9[%c0_48, %c0_49, %c0_50] : memref<1x8x32xf32, #tpu.memory_space<vmem>>, vector<1x8x32xf32>
    %88 = vector.shape_cast %87 : vector<1x8x32xf32> to vector<8x32xf32>
    %89 = vector.shape_cast %86 : vector<8x32xf32> to vector<1x8x32xf32>
    tpu.vector_store %arg9[%c0_48, %c0_49, %c0_50], %89 {strides = array<i32>} : memref<1x8x32xf32, #tpu.memory_space<vmem>>, vector<1x8x32xf32>,
    return
  }
  func.func @transform_0(%arg0: i32, %arg1: i32) -> (i32, i32, i32) {
    %c0_i32 = arith.constant 0 : i32
    %c0_i32_0 = arith.constant 0 : i32
    %c0_i32_1 = arith.constant 0 : i32
    return %arg0, %c0_i32, %c0_i32_0 : i32, i32, i32
  }
  func.func @transform_1(%arg0: i32, %arg1: i32) -> (i32, i32) {
    %c0_i32 = arith.constant 0 : i32
    %c0_i32_0 = arith.constant 0 : i32
    %c0_i32_1 = arith.constant 0 : i32
    return %c0_i32, %c0_i32_0 : i32, i32
  }
  func.func @transform_2(%arg0: i32, %arg1: i32) -> (i32, i32) {
    %c0_i32 = arith.constant 0 : i32
    %c0_i32_0 = arith.constant 0 : i32
    %c0_i32_1 = arith.constant 0 : i32
    return %c0_i32, %c0_i32_0 : i32, i32
  }
  func.func @transform_3(%arg0: i32, %arg1: i32) -> (i32, i32) {
    %c0_i32 = arith.constant 0 : i32
    %c0_i32_0 = arith.constant 0 : i32
    %c0_i32_1 = arith.constant 0 : i32
    return %c0_i32, %c0_i32_0 : i32, i32
  }
  func.func @transform_4(%arg0: i32, %arg1: i32) -> (i32, i32) {
    %c0_i32 = arith.constant 0 : i32
    %c0_i32_0 = arith.constant 0 : i32
    %c0_i32_1 = arith.constant 0 : i32
    return %c0_i32, %c0_i32_0 : i32, i32
  }
  func.func @transform_5(%arg0: i32, %arg1: i32) -> (i32, i32) {
    %c0_i32 = arith.constant 0 : i32
    %c0_i32_0 = arith.constant 0 : i32
    %c0_i32_1 = arith.constant 0 : i32
    return %c0_i32, %c0_i32_0 : i32, i32
  }
  func.func @transform_6(%arg0: i32, %arg1: i32) -> (i32, i32) {
    %c0_i32 = arith.constant 0 : i32
    %c0_i32_0 = arith.constant 0 : i32
    %c0_i32_1 = arith.constant 0 : i32
    return %c0_i32, %c0_i32_0 : i32, i32
  }
  func.func @transform_7(%arg0: i32, %arg1: i32) -> (i32, i32, i32) {
    %c0_i32 = arith.constant 0 : i32
    %c0_i32_0 = arith.constant 0 : i32
    return %arg0, %arg1, %c0_i32 : i32, i32, i32
  }
}

</mosaic_0001>

<llo_original>
// kernel: tpu_custom_call.1
$region0: #{tpu_custom_call.1}
  #allocation0 [shape = 'u32[]', space=smem, size = 0x4, offset = 0x4, fixed_abs, tag = 'smem constant byte address 0x4 - core index']
  #allocation1 [shape = 'u32[144,128]{1,0:T(1,128)}', space=vmem, size = 0x12000, scoped, tag = 'internal scratch']
  #allocation2 [shape = 'f32[4,8,8]{2,1,0:T(8,128)}', space=vmem, size = 0x4000, scoped, tag = 'scratch operand']
  #allocation3 [shape = 'f32[4,8,8]{2,1,0:T(8,128)}', space=vmem, size = 0x4000, scoped, tag = 'scratch operand']
  %s0 = inlined_call_operand.hbm [shape: f32[2,8,32], index: 0, kind: input, shape index: {}]
  %s1 = inlined_call_operand.hbm [shape: f32[32,32], index: 1, kind: input, shape index: {}]
  %s2 = inlined_call_operand.vmem [shape: f32[1,32], index: 2, kind: input, shape index: {}]
  %s3 = inlined_call_operand.hbm [shape: f32[32,64], index: 3, kind: input, shape index: {}]
  %s4 = inlined_call_operand.vmem [shape: f32[1,64], index: 4, kind: input, shape index: {}]
  %s5 = inlined_call_operand.hbm [shape: f32[32,32], index: 5, kind: input, shape index: {}]
  %s6 = inlined_call_operand.vmem [shape: f32[1,32], index: 6, kind: input, shape index: {}]
  %s7 = inlined_call_operand.hbm [shape: f32[2,8,32], index: 7, kind: output, shape index: {}]
  %s8 = sld [smem:[#allocation0]]
  $region81: #{tpu_custom_call.1} parent=0
    _
  %s10 = ssub.s32 1, %s8
  %s11 = scalar_select 0, %s10, %s8
  $region1: #{tpu_custom_call.1} parent=0
    #allocation4 [shape = 'u8[8192]{0}', space=vmem, size = 0x2000, scoped, tag = 'input window, operand 0']
    #allocation5 [shape = 's32[2]{0}', space=sflag, size = 0x8, scoped, tag = 'scoped memory for tpu_custom_call.1']
    #allocation6 [shape = 's32[2]{0}', space=sflag, size = 0x8, scoped, tag = 'scoped memory for tpu_custom_call.1']
    #allocation7 [shape = 'u8[16384]{0}', space=vmem, size = 0x4000, scoped, tag = 'input window, operand 1, single buffered']
    #allocation8 [shape = 's32[1]{0}', space=sflag, size = 0x4, scoped, tag = 'scoped memory for tpu_custom_call.1']
    #allocation9 [shape = 'u8[16384]{0}', space=vmem, size = 0x4000, scoped, tag = 'input window, operand 3, single buffered']
    #allocation10 [shape = 'u8[16384]{0}', space=vmem, size = 0x4000, scoped, tag = 'input window, operand 5, single buffered']
    #allocation11 [shape = 's32[1]{0}', space=sflag, size = 0x4, scoped, tag = 'scoped memory for tpu_custom_call.1']
    #allocation12 [shape = 'u8[8192]{0}', space=vmem, size = 0x2000, scoped, tag = 'output window, operand 0']
    %12 = vsyncpa [#allocation5], 0
    %s13 = scalar_lea.sflag [#allocation5], 1
    %14 = vsyncpa %s13, 0
    %15 = vsyncpa [#allocation8], 0
    %16 = vsyncpa [#allocation11], 0
    %17 = vsyncpa [#allocation6], 0
    %s18 = scalar_lea.sflag [#allocation6], 1
    %19 = vsyncpa %s18, 0
    loop: start=0, step=1, limit=4
    $region2: #{tpu_custom_call.1} parent=1 // loop_pre_header
      _
    $region3: #{tpu_custom_call.1} parent=1 // loop_header
      %s21 = sphi 0, %s25
      %p22 = scmp.ge.s32.totalorder %s21, 4
      %s28 = sphi 0, %s40
      %s29 = sphi 0, %s36
      %s30 = sphi 0, %s28
      %s31 = sphi 0, %s29
      %s32 = sphi 0, %s30
      %s33 = sphi 0, %s31
      %s43 = sphi 0, %s45
      %s46 = sphi 0, %s43
      %s47 = sphi 0, %s46
      %s63 = sphi 0, %s47
      %s67 = sphi 0, %s67
      %s69 = sphi 0, %s67
      %s70 = sphi 0, %s69
      %s84 = sphi 0, %s70
      %s88 = sphi 0, %s88
      %s90 = sphi 0, %s88
      %s91 = sphi 0, %s90
      %s105 = sphi 0, %s91
      %s109 = sphi 0, %s109
      %s111 = sphi 0, %s109
      %s112 = sphi 0, %s111
      %s126 = sphi 0, %s112
      %s130 = sphi 0, %s130
      %s132 = sphi 0, %s130
      %s133 = sphi 0, %s132
      %s147 = sphi 0, %s133
      %s151 = sphi 0, %s151
      %s153 = sphi 0, %s151
      %s154 = sphi 0, %s153
      %s168 = sphi 0, %s154
      %s172 = sphi 0, %s172
      %s174 = sphi 0, %s172
      %s175 = sphi 0, %s174
      %s189 = sphi 0, %s175
      %s197 = sphi 0, %s199
      %s200 = sphi 0, %s197
      %s201 = sphi 0, %s200
      %s217 = sphi 0, %s201
    $region4: #{tpu_custom_call.1} parent=1 // loop_header_branch
      %24 = sbr.rel (%p22) target = $region8
    $region5: #{tpu_custom_call.1} parent=1 // loop_body
      %s26 = ssub.s32 %s21, 1
      %s27 = ssub.s32 %s21, 2
      %s34 = sadd.s32 1, %s29
      %p35 = scmp.ge.s32.totalorder %s34, 1
      %s36 = scalar_select %p35, 0, %s34
      %s37 = sadd.s32 1, %s28
      %s38 = scalar_select %p35, %s37, %s28
      %p39 = scmp.ge.s32.totalorder %s38, 2
      %s40 = scalar_select %p39, 0, %s38
      %s41 = ssub.s32 %s28, %s40
      %p42 = scmp.eq.s32.totalorder %s41, 0
      %s44 = sadd.s32 %s43, 1
      %s45 = scalar_select %p42, %s43, %s44
      %p48 = pneg %p42
      %p49 = scmp.eq.s32.totalorder %s21, 1
      %p50 = por %p48, %p49
      %p51 = scmp.ne.s32.totalorder %s43, %s46
      %p52 = scmp.eq.s32.totalorder %s21, 0
      %p53 = por %p51, %p52
      %p54 = scmp.ne.s32.totalorder %s43, %s46
      %p55 = scmp.eq.s32.totalorder %s26, 1
      %p56 = por %p54, %p55
      %p57 = scmp.ne.s32.totalorder %s46, %s47
      %p58 = scmp.eq.s32.totalorder %s26, 0
      %p59 = por %p57, %p58
      %p60 = scmp.ne.s32.totalorder %s46, %s47
      %p61 = scmp.eq.s32.totalorder %s27, 1
      %p62 = por %p60, %p61
      %p64 = scmp.ne.s32.totalorder %s47, %s63
      %p65 = scmp.eq.s32.totalorder %s27, 0
      %p66 = por %p64, %p65
      %s68 = sadd.s32 %s67, 1
      %p71 = scmp.eq.s32.totalorder %s21, 1
      %p72 = scmp.ne.s32.totalorder %s67, %s69
      %p73 = scmp.eq.s32.totalorder %s21, 0
      %p74 = por %p72, %p73
      %p75 = scmp.ne.s32.totalorder %s67, %s69
      %p76 = scmp.eq.s32.totalorder %s26, 1
      %p77 = por %p75, %p76
      %p78 = scmp.ne.s32.totalorder %s69, %s70
      %p79 = scmp.eq.s32.totalorder %s26, 0
      %p80 = por %p78, %p79
      %p81 = scmp.ne.s32.totalorder %s69, %s70
      %p82 = scmp.eq.s32.totalorder %s27, 1
      %p83 = por %p81, %p82
      %p85 = scmp.ne.s32.totalorder %s70, %s84
      %p86 = scmp.eq.s32.totalorder %s27, 0
      %p87 = por %p85, %p86
      %s89 = sadd.s32 %s88, 1
      %p92 = scmp.eq.s32.totalorder %s21, 1
      %p93 = scmp.ne.s32.totalorder %s88, %s90
      %p94 = scmp.eq.s32.totalorder %s21, 0
      %p95 = por %p93, %p94
      %p96 = scmp.ne.s32.totalorder %s88, %s90
      %p97 = scmp.eq.s32.totalorder %s26, 1
      %p98 = por %p96, %p97
      %p99 = scmp.ne.s32.totalorder %s90, %s91
      %p100 = scmp.eq.s32.totalorder %s26, 0
      %p101 = por %p99, %p100
      %p102 = scmp.ne.s32.totalorder %s90, %s91
      %p103 = scmp.eq.s32.totalorder %s27, 1
      %p104 = por %p102, %p103
      %p106 = scmp.ne.s32.totalorder %s91, %s105
      %p107 = scmp.eq.s32.totalorder %s27, 0
      %p108 = por %p106, %p107
      %s110 = sadd.s32 %s109, 1
      %p113 = scmp.eq.s32.totalorder %s21, 1
      %p114 = scmp.ne.s32.totalorder %s109, %s111
      %p115 = scmp.eq.s32.totalorder %s21, 0
      %p116 = por %p114, %p115
      %p117 = scmp.ne.s32.totalorder %s109, %s111
      %p118 = scmp.eq.s32.totalorder %s26, 1
      %p119 = por %p117, %p118
      %p120 = scmp.ne.s32.totalorder %s111, %s112
      %p121 = scmp.eq.s32.totalorder %s26, 0
      %p122 = por %p120, %p121
      %p123 = scmp.ne.s32.totalorder %s111, %s112
      %p124 = scmp.eq.s32.totalorder %s27, 1
      %p125 = por %p123, %p124
      %p127 = scmp.ne.s32.totalorder %s112, %s126
      %p128 = scmp.eq.s32.totalorder %s27, 0
      %p129 = por %p127, %p128
      %s131 = sadd.s32 %s130, 1
      %p134 = scmp.eq.s32.totalorder %s21, 1
      %p135 = scmp.ne.s32.totalorder %s130, %s132
      %p136 = scmp.eq.s32.totalorder %s21, 0
      %p137 = por %p135, %p136
      %p138 = scmp.ne.s32.totalorder %s130, %s132
      %p139 = scmp.eq.s32.totalorder %s26, 1
      %p140 = por %p138, %p139
      %p141 = scmp.ne.s32.totalorder %s132, %s133
      %p142 = scmp.eq.s32.totalorder %s26, 0
      %p143 = por %p141, %p142
      %p144 = scmp.ne.s32.totalorder %s132, %s133
      %p145 = scmp.eq.s32.totalorder %s27, 1
      %p146 = por %p144, %p145
      %p148 = scmp.ne.s32.totalorder %s133, %s147
      %p149 = scmp.eq.s32.totalorder %s27, 0
      %p150 = por %p148, %p149
      %s152 = sadd.s32 %s151, 1
      %p155 = scmp.eq.s32.totalorder %s21, 1
      %p156 = scmp.ne.s32.totalorder %s151, %s153
      %p157 = scmp.eq.s32.totalorder %s21, 0
      %p158 = por %p156, %p157
      %p159 = scmp.ne.s32.totalorder %s151, %s153
      %p160 = scmp.eq.s32.totalorder %s26, 1
      %p161 = por %p159, %p160
      %p162 = scmp.ne.s32.totalorder %s153, %s154
      %p163 = scmp.eq.s32.totalorder %s26, 0
      %p164 = por %p162, %p163
      %p165 = scmp.ne.s32.totalorder %s153, %s154
      %p166 = scmp.eq.s32.totalorder %s27, 1
      %p167 = por %p165, %p166
      %p169 = scmp.ne.s32.totalorder %s154, %s168
      %p170 = scmp.eq.s32.totalorder %s27, 0
      %p171 = por %p169, %p170
      %s173 = sadd.s32 %s172, 1
      %p176 = scmp.eq.s32.totalorder %s21, 1
      %p177 = scmp.ne.s32.totalorder %s172, %s174
      %p178 = scmp.eq.s32.totalorder %s21, 0
      %p179 = por %p177, %p178
      %p180 = scmp.ne.s32.totalorder %s172, %s174
      %p181 = scmp.eq.s32.totalorder %s26, 1
      %p182 = por %p180, %p181
      %p183 = scmp.ne.s32.totalorder %s174, %s175
      %p184 = scmp.eq.s32.totalorder %s26, 0
      %p185 = por %p183, %p184
      %p186 = scmp.ne.s32.totalorder %s174, %s175
      %p187 = scmp.eq.s32.totalorder %s27, 1
      %p188 = por %p186, %p187
      %p190 = scmp.ne.s32.totalorder %s175, %s189
      %p191 = scmp.eq.s32.totalorder %s27, 0
      %p192 = por %p190, %p191
      %s193 = ssub.s32 %s28, %s40
      %s194 = ssub.s32 %s29, %s36
      %s195 = sor.u32 %s193, %s194
      %p196 = scmp.eq.s32.totalorder %s195, 0
      %s198 = sadd.s32 %s197, 1
      %s199 = scalar_select %p196, %s197, %s198
      %p202 = pneg %p196
      %p203 = scmp.eq.s32.totalorder %s21, 1
      %p204 = por %p202, %p203
      %p205 = scmp.ne.s32.totalorder %s197, %s200
      %p206 = scmp.eq.s32.totalorder %s21, 0
      %p207 = por %p205, %p206
      %p208 = scmp.ne.s32.totalorder %s197, %s200
      %p209 = scmp.eq.s32.totalorder %s26, 1
      %p210 = por %p208, %p209
      %p211 = scmp.ne.s32.totalorder %s200, %s201
      %p212 = scmp.eq.s32.totalorder %s26, 0
      %p213 = por %p211, %p212
      %p214 = scmp.ne.s32.totalorder %s200, %s201
      %p215 = scmp.eq.s32.totalorder %s27, 1
      %p216 = por %p214, %p215
      %p218 = scmp.ne.s32.totalorder %s201, %s217
      %p219 = scmp.eq.s32.totalorder %s27, 0
      %p220 = por %p218, %p219
      %p221 = scmp.le.s32.totalorder 1, %s21
      %p222 = scmp.lt.s32.totalorder %s21, 3
      %p223 = pnand %p221, %p222
      %p224 = pneg %p223
      // Predicated region
      $region9: #{tpu_custom_call.1} parent=5 // pred_check
        _
      $region10: #{tpu_custom_call.1} parent=5 // pred_check_branch
        %226 = sbr.rel (%p223) target = $region12
      $region11: #{tpu_custom_call.1} parent=5 // pred_region
        %s227 = ssub.s32 %s21, 1
        // Predicated region
        $region13: #{tpu_custom_call.1} parent=11 // pred_check
          %p228 = pneg %p80
        $region14: #{tpu_custom_call.1} parent=11 // pred_check_branch
          %230 = sbr.rel (%p228) target = $region16
        $region15: #{tpu_custom_call.1} parent=11 // pred_region
          %s232 = ssub.s32 512, 512
          %233 = vsyncadd [#allocation8], %s232
          %s234 = sshll.u32 [#allocation7], 4
          %s235 = int_to_ptr.vmem [resolvable:$true] %s234
          %240 = dma.hbm_to_vmem [thread:$0]  %s1, 512, %s235, [#allocation8], 128, 128, 8
        $region16: #{tpu_custom_call.1} parent=11 // pred_fallthru
          _
        // Predicated region
        $region17: #{tpu_custom_call.1} parent=11 // pred_check
          %p241 = pneg %p101
        $region18: #{tpu_custom_call.1} parent=11 // pred_check_branch
          %243 = sbr.rel (%p241) target = $region20
        $region19: #{tpu_custom_call.1} parent=11 // pred_region
          _
        $region20: #{tpu_custom_call.1} parent=11 // pred_fallthru
          _
        // Predicated region
        $region21: #{tpu_custom_call.1} parent=11 // pred_check
          %p244 = pneg %p122
        $region22: #{tpu_custom_call.1} parent=11 // pred_check_branch
          %246 = sbr.rel (%p244) target = $region24
        $region23: #{tpu_custom_call.1} parent=11 // pred_region
          %s248 = ssub.s32 512, 512
          %249 = vsyncadd [#allocation8], %s248
          %s250 = sshll.u32 [#allocation9], 4
          %s251 = int_to_ptr.vmem [resolvable:$true] %s250
          %256 = dma.hbm_to_vmem [thread:$0]  %s3, 512, %s251, [#allocation8], 128, 128, 8
        $region24: #{tpu_custom_call.1} parent=11 // pred_fallthru
          _
        // Predicated region
        $region25: #{tpu_custom_call.1} parent=11 // pred_check
          %p257 = pneg %p143
        $region26: #{tpu_custom_call.1} parent=11 // pred_check_branch
          %259 = sbr.rel (%p257) target = $region28
        $region27: #{tpu_custom_call.1} parent=11 // pred_region
          _
        $region28: #{tpu_custom_call.1} parent=11 // pred_fallthru
          _
        // Predicated region
        $region29: #{tpu_custom_call.1} parent=11 // pred_check
          %p260 = pneg %p164
        $region30: #{tpu_custom_call.1} parent=11 // pred_check_branch
          %262 = sbr.rel (%p260) target = $region32
        $region31: #{tpu_custom_call.1} parent=11 // pred_region
          %s264 = ssub.s32 512, 512
          %265 = vsyncadd [#allocation11], %s264
          %s266 = sshll.u32 [#allocation10], 4
          %s267 = int_to_ptr.vmem [resolvable:$true] %s266
          %272 = dma.hbm_to_vmem [thread:$0]  %s5, 512, %s267, [#allocation11], 128, 128, 8
        $region32: #{tpu_custom_call.1} parent=11 // pred_fallthru
          _
        // Predicated region
        $region33: #{tpu_custom_call.1} parent=11 // pred_check
          %p273 = pneg %p185
        $region34: #{tpu_custom_call.1} parent=11 // pred_check_branch
          %275 = sbr.rel (%p273) target = $region36
        $region35: #{tpu_custom_call.1} parent=11 // pred_region
          _
        $region36: #{tpu_custom_call.1} parent=11 // pred_fallthru
          _
      $region12: #{tpu_custom_call.1} parent=5 // pred_fallthru
        _
      %p276 = scmp.lt.s32.totalorder %s21, 2
      // Predicated region
      $region37: #{tpu_custom_call.1} parent=5 // pred_check
        %p277 = pneg %p276
      $region38: #{tpu_custom_call.1} parent=5 // pred_check_branch
        %279 = sbr.rel (%p277) target = $region40
      $region39: #{tpu_custom_call.1} parent=5 // pred_region
        // Predicated region
        $region41: #{tpu_custom_call.1} parent=39 // pred_check
          %p280 = pneg %p53
        $region42: #{tpu_custom_call.1} parent=39 // pred_check_branch
          %282 = sbr.rel (%p280) target = $region44
        $region43: #{tpu_custom_call.1} parent=39 // pred_region
          %s283 = sand.u32 %s43, 1
          %s284 = scalar_lea.sflag [#allocation5], %s283
          %s285 = sand.u32 %s43, 1
          %s286 = smul.addr %s285, 8
          %s287 = scalar_lea.vmem [#allocation4], %s286
          %s289 = ssub.s32 128, 128
          %290 = vsyncadd %s284, %s289
          %s291 = smul.addr %s28, 128
          %s292 = scalar_lea.hbm %s0, %s291
          %s294 = sshll.u32 %s287, 4
          %s295 = int_to_ptr.vmem [resolvable:$true] %s294
          %297 = dma.hbm_to_vmem [thread:$0]  %s292, 128, %s295, %s284
        $region44: #{tpu_custom_call.1} parent=39 // pred_fallthru
          _
      $region40: #{tpu_custom_call.1} parent=5 // pred_fallthru
        _
      %p298 = scmp.le.s32.totalorder 1, %s21
      %p299 = scmp.lt.s32.totalorder %s21, 3
      %p300 = pnand %p298, %p299
      %p301 = pneg %p300
      // Predicated region
      $region45: #{tpu_custom_call.1} parent=5 // pred_check
        _
      $region46: #{tpu_custom_call.1} parent=5 // pred_check_branch
        %303 = sbr.rel (%p300) target = $region48
      $region47: #{tpu_custom_call.1} parent=5 // pred_region
        %s304 = ssub.s32 %s21, 1
        %s305 = sand.u32 %s46, 1
        %s306 = scalar_lea.sflag [#allocation5], %s305
        %s307 = sand.u32 %s46, 1
        %s308 = smul.addr %s307, 8
        %s309 = scalar_lea.vmem [#allocation4], %s308
        // Predicated region
        $region49: #{tpu_custom_call.1} parent=47 // pred_check
          %p310 = pneg %p59
        $region50: #{tpu_custom_call.1} parent=47 // pred_check_branch
          %312 = sbr.rel (%p310) target = $region52
        $region51: #{tpu_custom_call.1} parent=47 // pred_region
          %313 = dma.done %s306, 128
        $region52: #{tpu_custom_call.1} parent=47 // pred_fallthru
          _
        // Predicated region
        $region53: #{tpu_custom_call.1} parent=47 // pred_check
          %p314 = pneg %p80
        $region54: #{tpu_custom_call.1} parent=47 // pred_check_branch
          %316 = sbr.rel (%p314) target = $region56
        $region55: #{tpu_custom_call.1} parent=47 // pred_region
          %317 = dma.done [#allocation8], 512
        $region56: #{tpu_custom_call.1} parent=47 // pred_fallthru
          _
        // Predicated region
        $region57: #{tpu_custom_call.1} parent=47 // pred_check
          %p318 = pneg %p122
        $region58: #{tpu_custom_call.1} parent=47 // pred_check_branch
          %320 = sbr.rel (%p318) target = $region60
        $region59: #{tpu_custom_call.1} parent=47 // pred_region
          %321 = dma.done [#allocation8], 512
        $region60: #{tpu_custom_call.1} parent=47 // pred_fallthru
          _
        // Predicated region
        $region61: #{tpu_custom_call.1} parent=47 // pred_check
          %p322 = pneg %p164
        $region62: #{tpu_custom_call.1} parent=47 // pred_check_branch
          %324 = sbr.rel (%p322) target = $region64
        $region63: #{tpu_custom_call.1} parent=47 // pred_region
          %325 = dma.done [#allocation11], 512
        $region64: #{tpu_custom_call.1} parent=47 // pred_fallthru
          _
        %s326 = sand.u32 %s46, 1
        %s327 = scalar_lea.sflag [#allocation5], %s326
        %s328 = sand.u32 %s46, 1
        %s329 = smul.addr %s328, 8
        %s330 = scalar_lea.vmem [#allocation4], %s329
        %p331 = pneg %p59
        %p332 = pneg %p56
        %p333 = pneg %p80
        %p334 = pneg %p77
        %p335 = pneg %p101
        %p336 = pneg %p98
        %p337 = pneg %p122
        %p338 = pneg %p119
        %p339 = pneg %p143
        %p340 = pneg %p140
        %p341 = pneg %p164
        %p342 = pneg %p161
        %p343 = pneg %p185
        %p344 = pneg %p182
        %p345 = pneg %p213
        %p346 = pneg %p210
        %s347 = sand.u32 %s200, 1
        %s348 = scalar_lea.sflag [#allocation6], %s347
        %s349 = sand.u32 %s200, 1
        %s350 = smul.addr %s349, 8
        %s351 = scalar_lea.vmem [#allocation12], %s350
        %p352 = scmp.eq.s32.totalorder %s31, 0
        // Predicated region
        $region65: #{tpu_custom_call.1} parent=47 // pred_check
          %p353 = pneg %p352
        $region66: #{tpu_custom_call.1} parent=47 // pred_check_branch
          %355 = sbr.rel (%p353) target = $region68
        $region67: #{tpu_custom_call.1} parent=47 // pred_region
          %v356 = vld [vmem:[%s309] sm:$0xff]
          %v357 = vld [vmem:[#allocation9] sm:$0xff]
          %v358 = vld [vmem:[#allocation9 + $0x8] sm:$0xff]
          %v359 = vld [vmem:[#allocation9 + $0x10] sm:$0xff]
          %v360 = vld [vmem:[#allocation9 + $0x18] sm:$0xff]
          %v361 = vld [vmem:[%s4] sm:$0x1]
          %v363 = vlaneseq
          %v364 = vshrl.u32 %v363, 7
          %v365 = vsub.s32 0, %v364
          %v366 = vrot.slane %v361, %v365
          %vm368 = vcmask 261120
          %v370 = vsel %vm368, %v356, 0
          %372 = vmatprep.subr.mxu0 0.0
          %373 = vmatpush1.msra.mxu0 %v357
          %374 = vmatprep.subr.mxu0 0.0
          %375 = vmatpush1.msra.mxu0 %v358
          %376 = vmatprep.subr.mxu0 0.0
          %377 = vmatpush1.msra.mxu0 %v359
          %378 = vmatprep.subr.mxu0 0.0
          %379 = vmatpush1.msra.mxu0 %v360
          %380 = vmatprep.subr.mxu0 0.0
          %381 = vmatpush1.msra.mxu0 0.0
          %382 = vmatprep.subr.mxu0 0.0
          %383 = vmatpush1.msra.mxu0 0.0
          %384 = vmatprep.subr.mxu0 0.0
          %385 = vmatpush1.msra.mxu0 0.0
          %386 = vmatprep.subr.mxu0 0.0
          %387 = vmatpush1.msra.mxu0 0.0
          %388 = vmatprep.subr.mxu0 0.0
          %389 = vmatpush1.msra.mxu0 0.0
          %390 = vmatprep.subr.mxu0 0.0
          %391 = vmatpush1.msra.mxu0 0.0
          %392 = vmatprep.subr.mxu0 0.0
          %393 = vmatpush1.msra.mxu0 0.0
          %394 = vmatprep.subr.mxu0 0.0
          %395 = vmatpush1.msra.mxu0 0.0
          %396 = vmatprep.subr.mxu0 0.0
          %397 = vmatpush1.msra.mxu0 0.0
          %398 = vmatprep.subr.mxu0 0.0
          %399 = vmatpush1.msra.mxu0 0.0
          %400 = vmatprep.subr.mxu0 0.0
          %401 = vmatpush1.msra.mxu0 0.0
          %402 = vmatprep.subr.mxu0 0.0
          %403 = vmatpush1.msra.mxu0 0.0
          %404 = vmatprep.subr.mxu0 0.0
          %405 = vmatpush1.msra.mxu0 0.0
          %406 = vmatprep.subr.mxu0 0.0
          %407 = vmatpush1.msra.mxu0 0.0
          %408 = vmatprep.subr.mxu0 0.0
          %409 = vmatpush1.msra.mxu0 0.0
          %410 = vmatprep.subr.mxu0 0.0
          %411 = vmatpush1.msra.mxu0 0.0
          %412 = vmatprep.subr.mxu0 0.0
          %413 = vmatpush1.msra.mxu0 0.0
          %414 = vmatprep.subr.mxu0 0.0
          %415 = vmatpush1.msra.mxu0 0.0
          %416 = vmatprep.subr.mxu0 0.0
          %417 = vmatpush1.msra.mxu0 0.0
          %418 = vmatprep.subr.mxu0 0.0
          %419 = vmatpush1.msra.mxu0 0.0
          %420 = vmatprep.subr.mxu0 0.0
          %421 = vmatpush1.msra.mxu0 0.0
          %422 = vmatprep.subr.mxu0 0.0
          %423 = vmatpush1.msra.mxu0 0.0
          %424 = vmatprep.subr.mxu0 0.0
          %425 = vmatpush1.msra.mxu0 0.0
          %426 = vmatprep.subr.mxu0 0.0
          %427 = vmatpush1.msra.mxu0 0.0
          %428 = vmatprep.subr.mxu0 0.0
          %429 = vmatpush1.msra.mxu0 0.0
          %430 = vmatprep.subr.mxu0 0.0
          %431 = vmatpush1.msra.mxu0 0.0
          %432 = vmatprep.subr.mxu0 0.0
          %433 = vmatpush1.msra.mxu0 0.0
          %434 = vmatprep.subr.mxu0 0.0
          %435 = vmatpush1.msra.mxu0 0.0
          %436 = vmatprep.mubr.f32.mxu0 0.0
          %437 = vmatmul.mubr.f32.gmra.mrb[0].mxu0 %v370
          %v438 = vpop.f32.mrb[0].mxu0
          %v439 = vadd.f32 %v366, %v438
          %v440 = vpop.f32.mrb[0].mxu0
          %441 = vdwg.mxu0
          %442 = vxpose.xlu0.b32.start [1/16] %v439, 128
          %443 = vxpose.xlu0.b32.cont [2/16] 0.0, 128
          %444 = vxpose.xlu0.b32.cont [3/16] 0.0, 128
          %445 = vxpose.xlu0.b32.cont [4/16] 0.0, 128
          %446 = vxpose.xlu0.b32.cont [5/16] 0.0, 128
          %447 = vxpose.xlu0.b32.cont [6/16] 0.0, 128
          %448 = vxpose.xlu0.b32.cont [7/16] 0.0, 128
          %449 = vxpose.xlu0.b32.cont [8/16] 0.0, 128
          %450 = vxpose.xlu0.b32.cont [9/16] 0.0, 128
          %451 = vxpose.xlu0.b32.cont [10/16] 0.0, 128
          %452 = vxpose.xlu0.b32.cont [11/16] 0.0, 128
          %453 = vxpose.xlu0.b32.cont [12/16] 0.0, 128
          %454 = vxpose.xlu0.b32.cont [13/16] 0.0, 128
          %455 = vxpose.xlu0.b32.cont [14/16] 0.0, 128
          %456 = vxpose.xlu0.b32.cont [15/16] 0.0, 128
          %457 = vxpose.xlu0.b32.end [16/16] 0.0, 128
          %v458 = vpop.trf.xlu0
          %v459 = vpop.trf.xlu0
          %v460 = vpop.trf.xlu0
          %v461 = vpop.trf.xlu0
          %v462 = vpop.trf.xlu0
          %v463 = vpop.trf.xlu0
          %v464 = vpop.trf.xlu0
          %v465 = vpop.trf.xlu0
          %v466 = vpop.trf.xlu0
          %v467 = vpop.trf.xlu0
          %v468 = vpop.trf.xlu0
          %v469 = vpop.trf.xlu0
          %v470 = vpop.trf.xlu0
          %v471 = vpop.trf.xlu0
          %v472 = vpop.trf.xlu0
          %v473 = vpop.trf.xlu0
          %vm474 = vcmask 64512
          %475 = vst.msk [vmem:[#allocation2] sm:$0xff] %vm474, %v458
          %477 = vrot.lane.b32.xlu0 %v439, 96
          %v478 = vpop.permute.xlu0 %477
          %480 = vxpose.xlu0.b32.start [1/16] %v478, 128
          %481 = vxpose.xlu0.b32.cont [2/16] 0.0, 128
          %482 = vxpose.xlu0.b32.cont [3/16] 0.0, 128
          %483 = vxpose.xlu0.b32.cont [4/16] 0.0, 128
          %484 = vxpose.xlu0.b32.cont [5/16] 0.0, 128
          %485 = vxpose.xlu0.b32.cont [6/16] 0.0, 128
          %486 = vxpose.xlu0.b32.cont [7/16] 0.0, 128
          %487 = vxpose.xlu0.b32.cont [8/16] 0.0, 128
          %488 = vxpose.xlu0.b32.cont [9/16] 0.0, 128
          %489 = vxpose.xlu0.b32.cont [10/16] 0.0, 128
          %490 = vxpose.xlu0.b32.cont [11/16] 0.0, 128
          %491 = vxpose.xlu0.b32.cont [12/16] 0.0, 128
          %492 = vxpose.xlu0.b32.cont [13/16] 0.0, 128
          %493 = vxpose.xlu0.b32.cont [14/16] 0.0, 128
          %494 = vxpose.xlu0.b32.cont [15/16] 0.0, 128
          %495 = vxpose.xlu0.b32.end [16/16] 0.0, 128
          %v496 = vpop.trf.xlu0
          %v497 = vpop.trf.xlu0
          %v498 = vpop.trf.xlu0
          %v499 = vpop.trf.xlu0
          %v500 = vpop.trf.xlu0
          %v501 = vpop.trf.xlu0
          %v502 = vpop.trf.xlu0
          %v503 = vpop.trf.xlu0
          %v504 = vpop.trf.xlu0
          %v505 = vpop.trf.xlu0
          %v506 = vpop.trf.xlu0
          %v507 = vpop.trf.xlu0
          %v508 = vpop.trf.xlu0
          %v509 = vpop.trf.xlu0
          %v510 = vpop.trf.xlu0
          %v511 = vpop.trf.xlu0
          %512 = vst.msk [vmem:[#allocation3] sm:$0xff] %vm474, %v496
          %513 = vrot.lane.b32.xlu0 %v439, 120
          %v514 = vpop.permute.xlu0 %513
          %516 = vxpose.xlu0.b32.start [1/16] %v514, 128
          %517 = vxpose.xlu0.b32.cont [2/16] 0.0, 128
          %518 = vxpose.xlu0.b32.cont [3/16] 0.0, 128
          %519 = vxpose.xlu0.b32.cont [4/16] 0.0, 128
          %520 = vxpose.xlu0.b32.cont [5/16] 0.0, 128
          %521 = vxpose.xlu0.b32.cont [6/16] 0.0, 128
          %522 = vxpose.xlu0.b32.cont [7/16] 0.0, 128
          %523 = vxpose.xlu0.b32.cont [8/16] 0.0, 128
          %524 = vxpose.xlu0.b32.cont [9/16] 0.0, 128
          %525 = vxpose.xlu0.b32.cont [10/16] 0.0, 128
          %526 = vxpose.xlu0.b32.cont [11/16] 0.0, 128
          %527 = vxpose.xlu0.b32.cont [12/16] 0.0, 128
          %528 = vxpose.xlu0.b32.cont [13/16] 0.0, 128
          %529 = vxpose.xlu0.b32.cont [14/16] 0.0, 128
          %530 = vxpose.xlu0.b32.cont [15/16] 0.0, 128
          %531 = vxpose.xlu0.b32.end [16/16] 0.0, 128
          %v532 = vpop.trf.xlu0
          %v533 = vpop.trf.xlu0
          %v534 = vpop.trf.xlu0
          %v535 = vpop.trf.xlu0
          %v536 = vpop.trf.xlu0
          %v537 = vpop.trf.xlu0
          %v538 = vpop.trf.xlu0
          %v539 = vpop.trf.xlu0
          %v540 = vpop.trf.xlu0
          %v541 = vpop.trf.xlu0
          %v542 = vpop.trf.xlu0
          %v543 = vpop.trf.xlu0
          %v544 = vpop.trf.xlu0
          %v545 = vpop.trf.xlu0
          %v546 = vpop.trf.xlu0
          %v547 = vpop.trf.xlu0
          %s548 = scalar_lea.vmem [#allocation2], 8
          %549 = vst.msk [vmem:[%s548] sm:$0xff] %vm474, %v532
          %550 = vrot.lane.b32.xlu0 %v439, 88
          %v551 = vpop.permute.xlu0 %550
          %553 = vxpose.xlu0.b32.start [1/16] %v551, 128
          %554 = vxpose.xlu0.b32.cont [2/16] 0.0, 128
          %555 = vxpose.xlu0.b32.cont [3/16] 0.0, 128
          %556 = vxpose.xlu0.b32.cont [4/16] 0.0, 128
          %557 = vxpose.xlu0.b32.cont [5/16] 0.0, 128
          %558 = vxpose.xlu0.b32.cont [6/16] 0.0, 128
          %559 = vxpose.xlu0.b32.cont [7/16] 0.0, 128
          %560 = vxpose.xlu0.b32.cont [8/16] 0.0, 128
          %561 = vxpose.xlu0.b32.cont [9/16] 0.0, 128
          %562 = vxpose.xlu0.b32.cont [10/16] 0.0, 128
          %563 = vxpose.xlu0.b32.cont [11/16] 0.0, 128
          %564 = vxpose.xlu0.b32.cont [12/16] 0.0, 128
          %565 = vxpose.xlu0.b32.cont [13/16] 0.0, 128
          %566 = vxpose.xlu0.b32.cont [14/16] 0.0, 128
          %567 = vxpose.xlu0.b32.cont [15/16] 0.0, 128
          %568 = vxpose.xlu0.b32.end [16/16] 0.0, 128
          %v569 = vpop.trf.xlu0
          %v570 = vpop.trf.xlu0
          %v571 = vpop.trf.xlu0
          %v572 = vpop.trf.xlu0
          %v573 = vpop.trf.xlu0
          %v574 = vpop.trf.xlu0
          %v575 = vpop.trf.xlu0
          %v576 = vpop.trf.xlu0
          %v577 = vpop.trf.xlu0
          %v578 = vpop.trf.xlu0
          %v579 = vpop.trf.xlu0
          %v580 = vpop.trf.xlu0
          %v581 = vpop.trf.xlu0
          %v582 = vpop.trf.xlu0
          %v583 = vpop.trf.xlu0
          %v584 = vpop.trf.xlu0
          %s585 = scalar_lea.vmem [#allocation3], 8
          %586 = vst.msk [vmem:[%s585] sm:$0xff] %vm474, %v569
          %587 = vrot.lane.b32.xlu0 %v439, 112
          %v588 = vpop.permute.xlu0 %587
          %590 = vxpose.xlu0.b32.start [1/16] %v588, 128
          %591 = vxpose.xlu0.b32.cont [2/16] 0.0, 128
          %592 = vxpose.xlu0.b32.cont [3/16] 0.0, 128
          %593 = vxpose.xlu0.b32.cont [4/16] 0.0, 128
          %594 = vxpose.xlu0.b32.cont [5/16] 0.0, 128
          %595 = vxpose.xlu0.b32.cont [6/16] 0.0, 128
          %596 = vxpose.xlu0.b32.cont [7/16] 0.0, 128
          %597 = vxpose.xlu0.b32.cont [8/16] 0.0, 128
          %598 = vxpose.xlu0.b32.cont [9/16] 0.0, 128
          %599 = vxpose.xlu0.b32.cont [10/16] 0.0, 128
          %600 = vxpose.xlu0.b32.cont [11/16] 0.0, 128
          %601 = vxpose.xlu0.b32.cont [12/16] 0.0, 128
          %602 = vxpose.xlu0.b32.cont [13/16] 0.0, 128
          %603 = vxpose.xlu0.b32.cont [14/16] 0.0, 128
          %604 = vxpose.xlu0.b32.cont [15/16] 0.0, 128
          %605 = vxpose.xlu0.b32.end [16/16] 0.0, 128
          %v606 = vpop.trf.xlu0
          %v607 = vpop.trf.xlu0
          %v608 = vpop.trf.xlu0
          %v609 = vpop.trf.xlu0
          %v610 = vpop.trf.xlu0
          %v611 = vpop.trf.xlu0
          %v612 = vpop.trf.xlu0
          %v613 = vpop.trf.xlu0
          %v614 = vpop.trf.xlu0
          %v615 = vpop.trf.xlu0
          %v616 = vpop.trf.xlu0
          %v617 = vpop.trf.xlu0
          %v618 = vpop.trf.xlu0
          %v619 = vpop.trf.xlu0
          %v620 = vpop.trf.xlu0
          %v621 = vpop.trf.xlu0
          %s622 = scalar_lea.vmem [#allocation2], 16
          %623 = vst.msk [vmem:[%s622] sm:$0xff] %vm474, %v606
          %624 = vrot.lane.b32.xlu0 %v439, 80
          %v625 = vpop.permute.xlu0 %624
          %627 = vxpose.xlu0.b32.start [1/16] %v625, 128
          %628 = vxpose.xlu0.b32.cont [2/16] 0.0, 128
          %629 = vxpose.xlu0.b32.cont [3/16] 0.0, 128
          %630 = vxpose.xlu0.b32.cont [4/16] 0.0, 128
          %631 = vxpose.xlu0.b32.cont [5/16] 0.0, 128
          %632 = vxpose.xlu0.b32.cont [6/16] 0.0, 128
          %633 = vxpose.xlu0.b32.cont [7/16] 0.0, 128
          %634 = vxpose.xlu0.b32.cont [8/16] 0.0, 128
          %635 = vxpose.xlu0.b32.cont [9/16] 0.0, 128
          %636 = vxpose.xlu0.b32.cont [10/16] 0.0, 128
          %637 = vxpose.xlu0.b32.cont [11/16] 0.0, 128
          %638 = vxpose.xlu0.b32.cont [12/16] 0.0, 128
          %639 = vxpose.xlu0.b32.cont [13/16] 0.0, 128
          %640 = vxpose.xlu0.b32.cont [14/16] 0.0, 128
          %641 = vxpose.xlu0.b32.cont [15/16] 0.0, 128
          %642 = vxpose.xlu0.b32.end [16/16] 0.0, 128
          %v643 = vpop.trf.xlu0
          %v644 = vpop.trf.xlu0
          %v645 = vpop.trf.xlu0
          %v646 = vpop.trf.xlu0
          %v647 = vpop.trf.xlu0
          %v648 = vpop.trf.xlu0
          %v649 = vpop.trf.xlu0
          %v650 = vpop.trf.xlu0
          %v651 = vpop.trf.xlu0
          %v652 = vpop.trf.xlu0
          %v653 = vpop.trf.xlu0
          %v654 = vpop.trf.xlu0
          %v655 = vpop.trf.xlu0
          %v656 = vpop.trf.xlu0
          %v657 = vpop.trf.xlu0
          %v658 = vpop.trf.xlu0
          %s659 = scalar_lea.vmem [#allocation3], 16
          %660 = vst.msk [vmem:[%s659] sm:$0xff] %vm474, %v643
          %661 = vrot.lane.b32.xlu0 %v439, 104
          %v662 = vpop.permute.xlu0 %661
          %664 = vxpose.xlu0.b32.start [1/16] %v662, 128
          %665 = vxpose.xlu0.b32.cont [2/16] 0.0, 128
          %666 = vxpose.xlu0.b32.cont [3/16] 0.0, 128
          %667 = vxpose.xlu0.b32.cont [4/16] 0.0, 128
          %668 = vxpose.xlu0.b32.cont [5/16] 0.0, 128
          %669 = vxpose.xlu0.b32.cont [6/16] 0.0, 128
          %670 = vxpose.xlu0.b32.cont [7/16] 0.0, 128
          %671 = vxpose.xlu0.b32.cont [8/16] 0.0, 128
          %672 = vxpose.xlu0.b32.cont [9/16] 0.0, 128
          %673 = vxpose.xlu0.b32.cont [10/16] 0.0, 128
          %674 = vxpose.xlu0.b32.cont [11/16] 0.0, 128
          %675 = vxpose.xlu0.b32.cont [12/16] 0.0, 128
          %676 = vxpose.xlu0.b32.cont [13/16] 0.0, 128
          %677 = vxpose.xlu0.b32.cont [14/16] 0.0, 128
          %678 = vxpose.xlu0.b32.cont [15/16] 0.0, 128
          %679 = vxpose.xlu0.b32.end [16/16] 0.0, 128
          %v680 = vpop.trf.xlu0
          %v681 = vpop.trf.xlu0
          %v682 = vpop.trf.xlu0
          %v683 = vpop.trf.xlu0
          %v684 = vpop.trf.xlu0
          %v685 = vpop.trf.xlu0
          %v686 = vpop.trf.xlu0
          %v687 = vpop.trf.xlu0
          %v688 = vpop.trf.xlu0
          %v689 = vpop.trf.xlu0
          %v690 = vpop.trf.xlu0
          %v691 = vpop.trf.xlu0
          %v692 = vpop.trf.xlu0
          %v693 = vpop.trf.xlu0
          %v694 = vpop.trf.xlu0
          %v695 = vpop.trf.xlu0
          %s696 = scalar_lea.vmem [#allocation2], 24
          %697 = vst.msk [vmem:[%s696] sm:$0xff] %vm474, %v680
          %698 = vrot.lane.b32.xlu0 %v439, 72
          %v699 = vpop.permute.xlu0 %698
          %701 = vxpose.xlu0.b32.start [1/16] %v699, 128
          %702 = vxpose.xlu0.b32.cont [2/16] 0.0, 128
          %703 = vxpose.xlu0.b32.cont [3/16] 0.0, 128
          %704 = vxpose.xlu0.b32.cont [4/16] 0.0, 128
          %705 = vxpose.xlu0.b32.cont [5/16] 0.0, 128
          %706 = vxpose.xlu0.b32.cont [6/16] 0.0, 128
          %707 = vxpose.xlu0.b32.cont [7/16] 0.0, 128
          %708 = vxpose.xlu0.b32.cont [8/16] 0.0, 128
          %709 = vxpose.xlu0.b32.cont [9/16] 0.0, 128
          %710 = vxpose.xlu0.b32.cont [10/16] 0.0, 128
          %711 = vxpose.xlu0.b32.cont [11/16] 0.0, 128
          %712 = vxpose.xlu0.b32.cont [12/16] 0.0, 128
          %713 = vxpose.xlu0.b32.cont [13/16] 0.0, 128
          %714 = vxpose.xlu0.b32.cont [14/16] 0.0, 128
          %715 = vxpose.xlu0.b32.cont [15/16] 0.0, 128
          %716 = vxpose.xlu0.b32.end [16/16] 0.0, 128
          %v717 = vpop.trf.xlu0
          %v718 = vpop.trf.xlu0
          %v719 = vpop.trf.xlu0
          %v720 = vpop.trf.xlu0
          %v721 = vpop.trf.xlu0
          %v722 = vpop.trf.xlu0
          %v723 = vpop.trf.xlu0
          %v724 = vpop.trf.xlu0
          %v725 = vpop.trf.xlu0
          %v726 = vpop.trf.xlu0
          %v727 = vpop.trf.xlu0
          %v728 = vpop.trf.xlu0
          %v729 = vpop.trf.xlu0
          %v730 = vpop.trf.xlu0
          %v731 = vpop.trf.xlu0
          %v732 = vpop.trf.xlu0
          %s733 = scalar_lea.vmem [#allocation3], 24
          %734 = vst.msk [vmem:[%s733] sm:$0xff] %vm474, %v717
        $region68: #{tpu_custom_call.1} parent=47 // pred_fallthru
          _
        %s735 = smul.u32 %s31, 8
        %s736 = scalar_lea.vmem %s309, %s735 [#allocation4]
        %v737 = vld [vmem:[%s736] sm:$0xff]
        %v738 = vld [vmem:[#allocation7] sm:$0xff]
        %v739 = vld [vmem:[#allocation7 + $0x8] sm:$0xff]
        %v740 = vld [vmem:[#allocation7 + $0x10] sm:$0xff]
        %v741 = vld [vmem:[#allocation7 + $0x18] sm:$0xff]
        %v742 = vld [vmem:[%s2] sm:$0x1]
        %v744 = vlaneseq
        %v745 = vshrl.u32 %v744, 7
        %v746 = vsub.s32 0, %v745
        %v747 = vrot.slane %v742, %v746
        %vm749 = vcmask 261120
        %v751 = vsel %vm749, %v737, 0
        %753 = vmatprep.subr.mxu0 0.0
        %754 = vmatpush1.msra.mxu0 %v738
        %755 = vmatprep.subr.mxu0 0.0
        %756 = vmatpush1.msra.mxu0 %v739
        %757 = vmatprep.subr.mxu0 0.0
        %758 = vmatpush1.msra.mxu0 %v740
        %759 = vmatprep.subr.mxu0 0.0
        %760 = vmatpush1.msra.mxu0 %v741
        %761 = vmatprep.subr.mxu0 0.0
        %762 = vmatpush1.msra.mxu0 0.0
        %763 = vmatprep.subr.mxu0 0.0
        %764 = vmatpush1.msra.mxu0 0.0
        %765 = vmatprep.subr.mxu0 0.0
        %766 = vmatpush1.msra.mxu0 0.0
        %767 = vmatprep.subr.mxu0 0.0
        %768 = vmatpush1.msra.mxu0 0.0
        %769 = vmatprep.subr.mxu0 0.0
        %770 = vmatpush1.msra.mxu0 0.0
        %771 = vmatprep.subr.mxu0 0.0
        %772 = vmatpush1.msra.mxu0 0.0
        %773 = vmatprep.subr.mxu0 0.0
        %774 = vmatpush1.msra.mxu0 0.0
        %775 = vmatprep.subr.mxu0 0.0
        %776 = vmatpush1.msra.mxu0 0.0
        %777 = vmatprep.subr.mxu0 0.0
        %778 = vmatpush1.msra.mxu0 0.0
        %779 = vmatprep.subr.mxu0 0.0
        %780 = vmatpush1.msra.mxu0 0.0
        %781 = vmatprep.subr.mxu0 0.0
        %782 = vmatpush1.msra.mxu0 0.0
        %783 = vmatprep.subr.mxu0 0.0
        %784 = vmatpush1.msra.mxu0 0.0
        %785 = vmatprep.subr.mxu0 0.0
        %786 = vmatpush1.msra.mxu0 0.0
        %787 = vmatprep.subr.mxu0 0.0
        %788 = vmatpush1.msra.mxu0 0.0
        %789 = vmatprep.subr.mxu0 0.0
        %790 = vmatpush1.msra.mxu0 0.0
        %791 = vmatprep.subr.mxu0 0.0
        %792 = vmatpush1.msra.mxu0 0.0
        %793 = vmatprep.subr.mxu0 0.0
        %794 = vmatpush1.msra.mxu0 0.0
        %795 = vmatprep.subr.mxu0 0.0
        %796 = vmatpush1.msra.mxu0 0.0
        %797 = vmatprep.subr.mxu0 0.0
        %798 = vmatpush1.msra.mxu0 0.0
        %799 = vmatprep.subr.mxu0 0.0
        %800 = vmatpush1.msra.mxu0 0.0
        %801 = vmatprep.subr.mxu0 0.0
        %802 = vmatpush1.msra.mxu0 0.0
        %803 = vmatprep.subr.mxu0 0.0
        %804 = vmatpush1.msra.mxu0 0.0
        %805 = vmatprep.subr.mxu0 0.0
        %806 = vmatpush1.msra.mxu0 0.0
        %807 = vmatprep.subr.mxu0 0.0
        %808 = vmatpush1.msra.mxu0 0.0
        %809 = vmatprep.subr.mxu0 0.0
        %810 = vmatpush1.msra.mxu0 0.0
        %811 = vmatprep.subr.mxu0 0.0
        %812 = vmatpush1.msra.mxu0 0.0
        %813 = vmatprep.subr.mxu0 0.0
        %814 = vmatpush1.msra.mxu0 0.0
        %815 = vmatprep.subr.mxu0 0.0
        %816 = vmatpush1.msra.mxu0 0.0
        %817 = vmatprep.mubr.f32.mxu0 0.0
        %818 = vmatmul.mubr.f32.gmra.mrb[0].mxu0 %v751
        %v819 = vpop.f32.mrb[0].mxu0
        %v820 = vadd.f32 %v747, %v819
        %v821 = vpop.f32.mrb[0].mxu0
        %822 = vdwg.mxu0
        %v823 = vld [vmem:[#allocation2] sm:$0xff]
        %vm824 = vcmask 64512
        %v826 = vsel %vm824, %v820, 0
        %828 = vmatprep.subr.mxu0 0.0
        %829 = vmatpush1.msra.mxu0 %v823
        %830 = vmatprep.subr.mxu0 0.0
        %831 = vmatpush1.msra.mxu0 0.0
        %832 = vmatprep.subr.mxu0 0.0
        %833 = vmatpush1.msra.mxu0 0.0
        %834 = vmatprep.subr.mxu0 0.0
        %835 = vmatpush1.msra.mxu0 0.0
        %836 = vmatprep.subr.mxu0 0.0
        %837 = vmatpush1.msra.mxu0 0.0
        %838 = vmatprep.subr.mxu0 0.0
        %839 = vmatpush1.msra.mxu0 0.0
        %840 = vmatprep.subr.mxu0 0.0
        %841 = vmatpush1.msra.mxu0 0.0
        %842 = vmatprep.subr.mxu0 0.0
        %843 = vmatpush1.msra.mxu0 0.0
        %844 = vmatprep.subr.mxu0 0.0
        %845 = vmatpush1.msra.mxu0 0.0
        %846 = vmatprep.subr.mxu0 0.0
        %847 = vmatpush1.msra.mxu0 0.0
        %848 = vmatprep.subr.mxu0 0.0
        %849 = vmatpush1.msra.mxu0 0.0
        %850 = vmatprep.subr.mxu0 0.0
        %851 = vmatpush1.msra.mxu0 0.0
        %852 = vmatprep.subr.mxu0 0.0
        %853 = vmatpush1.msra.mxu0 0.0
        %854 = vmatprep.subr.mxu0 0.0
        %855 = vmatpush1.msra.mxu0 0.0
        %856 = vmatprep.subr.mxu0 0.0
        %857 = vmatpush1.msra.mxu0 0.0
        %858 = vmatprep.subr.mxu0 0.0
        %859 = vmatpush1.msra.mxu0 0.0
        %860 = vmatprep.subr.mxu0 0.0
        %861 = vmatpush1.msra.mxu0 0.0
        %862 = vmatprep.subr.mxu0 0.0
        %863 = vmatpush1.msra.mxu0 0.0
        %864 = vmatprep.subr.mxu0 0.0
        %865 = vmatpush1.msra.mxu0 0.0
        %866 = vmatprep.subr.mxu0 0.0
        %867 = vmatpush1.msra.mxu0 0.0
        %868 = vmatprep.subr.mxu0 0.0
        %869 = vmatpush1.msra.mxu0 0.0
        %870 = vmatprep.subr.mxu0 0.0
        %871 = vmatpush1.msra.mxu0 0.0
        %872 = vmatprep.subr.mxu0 0.0
        %873 = vmatpush1.msra.mxu0 0.0
        %874 = vmatprep.subr.mxu0 0.0
        %875 = vmatpush1.msra.mxu0 0.0
        %876 = vmatprep.subr.mxu0 0.0
        %877 = vmatpush1.msra.mxu0 0.0
        %878 = vmatprep.subr.mxu0 0.0
        %879 = vmatpush1.msra.mxu0 0.0
        %880 = vmatprep.subr.mxu0 0.0
        %881 = vmatpush1.msra.mxu0 0.0
        %882 = vmatprep.subr.mxu0 0.0
        %883 = vmatpush1.msra.mxu0 0.0
        %884 = vmatprep.subr.mxu0 0.0
        %885 = vmatpush1.msra.mxu0 0.0
        %886 = vmatprep.subr.mxu0 0.0
        %887 = vmatpush1.msra.mxu0 0.0
        %888 = vmatprep.subr.mxu0 0.0
        %889 = vmatpush1.msra.mxu0 0.0
        %890 = vmatprep.subr.mxu0 0.0
        %891 = vmatpush1.msra.mxu0 0.0
        %892 = vmatprep.mubr.f32.mxu0 0.0
        %893 = vmatmul.mubr.f32.gmra.mrb[0].mxu0 %v826
        %v894 = vpop.f32.mrb[0].mxu0
        %v895 = vadd.f32 0.0, %v894
        %v896 = vpop.f32.mrb[0].mxu0
        %897 = vdwg.mxu0
        %v898 = vsel %vm824, %v895, -inf
        %899 = vmax.xlane.f32.xlu0 %v898
        %v900 = vpop.xlane.xlu0 %899
        %v901 = vsub.f32 %v895, %v900
        %v902 = vmul.f32 %v901, 1.442695
        %v903 = vpow.pop %v902
        %v904 = vsel %vm824, %v903, 0.0
        %905 = vadd.xlane.f32.xlu0 %v904
        %v906 = vpop.xlane.xlu0 %905
        %v907 = vrcp.pop %v906
        %v908 = vmul.f32 %v903, %v907
        %v909 = vld [vmem:[#allocation3] sm:$0xff]
        %v911 = vsel %vm824, %v908, 0
        %v914 = vsel %vm824, %v909, 0
        %916 = vmatprep.subr.mxu0 0.0
        %917 = vmatpush1.xpose.msra.mxu0 %v914
        %918 = vmatprep.subr.mxu0 0.0
        %919 = vmatpush1.xpose.msra.mxu0 0.0
        %920 = vmatprep.subr.mxu0 0.0
        %921 = vmatpush1.xpose.msra.mxu0 0.0
        %922 = vmatprep.subr.mxu0 0.0
        %923 = vmatpush1.xpose.msra.mxu0 0.0
        %924 = vmatprep.subr.mxu0 0.0
        %925 = vmatpush1.xpose.msra.mxu0 0.0
        %926 = vmatprep.subr.mxu0 0.0
        %927 = vmatpush1.xpose.msra.mxu0 0.0
        %928 = vmatprep.subr.mxu0 0.0
        %929 = vmatpush1.xpose.msra.mxu0 0.0
        %930 = vmatprep.subr.mxu0 0.0
        %931 = vmatpush1.xpose.msra.mxu0 0.0
        %932 = vmatprep.subr.mxu0 0.0
        %933 = vmatpush1.xpose.msra.mxu0 0.0
        %934 = vmatprep.subr.mxu0 0.0
        %935 = vmatpush1.xpose.msra.mxu0 0.0
        %936 = vmatprep.subr.mxu0 0.0
        %937 = vmatpush1.xpose.msra.mxu0 0.0
        %938 = vmatprep.subr.mxu0 0.0
        %939 = vmatpush1.xpose.msra.mxu0 0.0
        %940 = vmatprep.subr.mxu0 0.0
        %941 = vmatpush1.xpose.msra.mxu0 0.0
        %942 = vmatprep.subr.mxu0 0.0
        %943 = vmatpush1.xpose.msra.mxu0 0.0
        %944 = vmatprep.subr.mxu0 0.0
        %945 = vmatpush1.xpose.msra.mxu0 0.0
        %946 = vmatprep.subr.mxu0 0.0
        %947 = vmatpush1.xpose.msra.mxu0 0.0
        %948 = vmatprep.subr.mxu0 0.0
        %949 = vmatpush1.xpose.msra.mxu0 0.0
        %950 = vmatprep.subr.mxu0 0.0
        %951 = vmatpush1.xpose.msra.mxu0 0.0
        %952 = vmatprep.subr.mxu0 0.0
        %953 = vmatpush1.xpose.msra.mxu0 0.0
        %954 = vmatprep.subr.mxu0 0.0
        %955 = vmatpush1.xpose.msra.mxu0 0.0
        %956 = vmatprep.subr.mxu0 0.0
        %957 = vmatpush1.xpose.msra.mxu0 0.0
        %958 = vmatprep.subr.mxu0 0.0
        %959 = vmatpush1.xpose.msra.mxu0 0.0
        %960 = vmatprep.subr.mxu0 0.0
        %961 = vmatpush1.xpose.msra.mxu0 0.0
        %962 = vmatprep.subr.mxu0 0.0
        %963 = vmatpush1.xpose.msra.mxu0 0.0
        %964 = vmatprep.subr.mxu0 0.0
        %965 = vmatpush1.xpose.msra.mxu0 0.0
        %966 = vmatprep.subr.mxu0 0.0
        %967 = vmatpush1.xpose.msra.mxu0 0.0
        %968 = vmatprep.subr.mxu0 0.0
        %969 = vmatpush1.xpose.msra.mxu0 0.0
        %970 = vmatprep.subr.mxu0 0.0
        %971 = vmatpush1.xpose.msra.mxu0 0.0
        %972 = vmatprep.subr.mxu0 0.0
        %973 = vmatpush1.xpose.msra.mxu0 0.0
        %974 = vmatprep.subr.mxu0 0.0
        %975 = vmatpush1.xpose.msra.mxu0 0.0
        %976 = vmatprep.subr.mxu0 0.0
        %977 = vmatpush1.xpose.msra.mxu0 0.0
        %978 = vmatprep.subr.mxu0 0.0
        %979 = vmatpush1.xpose.msra.mxu0 0.0
        %980 = vmatprep.mubr.f32.mxu0 0.0
        %981 = vmatmul.mubr.f32.gmra.mrb[0].mxu0 %v911
        %v982 = vpop.f32.mrb[0].mxu0
        %v983 = vadd.f32 0.0, %v982
        %v984 = vpop.f32.mrb[0].mxu0
        %985 = vdwg.mxu0
        %s986 = scalar_lea.vmem [#allocation2], 8
        %v987 = vld [vmem:[%s986] sm:$0xff]
        %988 = vrot.lane.b32.xlu0 %v820, 120
        %v989 = vpop.permute.xlu0 %988
        %v990 = vsel %vm824, %v989, 0
        %992 = vmatprep.subr.mxu0 0.0
        %993 = vmatpush1.msra.mxu0 %v987
        %994 = vmatprep.subr.mxu0 0.0
        %995 = vmatpush1.msra.mxu0 0.0
        %996 = vmatprep.subr.mxu0 0.0
        %997 = vmatpush1.msra.mxu0 0.0
        %998 = vmatprep.subr.mxu0 0.0
        %999 = vmatpush1.msra.mxu0 0.0
        %1000 = vmatprep.subr.mxu0 0.0
        %1001 = vmatpush1.msra.mxu0 0.0
        %1002 = vmatprep.subr.mxu0 0.0
        %1003 = vmatpush1.msra.mxu0 0.0
        %1004 = vmatprep.subr.mxu0 0.0
        %1005 = vmatpush1.msra.mxu0 0.0
        %1006 = vmatprep.subr.mxu0 0.0
        %1007 = vmatpush1.msra.mxu0 0.0
        %1008 = vmatprep.subr.mxu0 0.0
        %1009 = vmatpush1.msra.mxu0 0.0
        %1010 = vmatprep.subr.mxu0 0.0
        %1011 = vmatpush1.msra.mxu0 0.0
        %1012 = vmatprep.subr.mxu0 0.0
        %1013 = vmatpush1.msra.mxu0 0.0
        %1014 = vmatprep.subr.mxu0 0.0
        %1015 = vmatpush1.msra.mxu0 0.0
        %1016 = vmatprep.subr.mxu0 0.0
        %1017 = vmatpush1.msra.mxu0 0.0
        %1018 = vmatprep.subr.mxu0 0.0
        %1019 = vmatpush1.msra.mxu0 0.0
        %1020 = vmatprep.subr.mxu0 0.0
        %1021 = vmatpush1.msra.mxu0 0.0
        %1022 = vmatprep.subr.mxu0 0.0
        %1023 = vmatpush1.msra.mxu0 0.0
        %1024 = vmatprep.subr.mxu0 0.0
        %1025 = vmatpush1.msra.mxu0 0.0
        %1026 = vmatprep.subr.mxu0 0.0
        %1027 = vmatpush1.msra.mxu0 0.0
        %1028 = vmatprep.subr.mxu0 0.0
        %1029 = vmatpush1.msra.mxu0 0.0
        %1030 = vmatprep.subr.mxu0 0.0
        %1031 = vmatpush1.msra.mxu0 0.0
        %1032 = vmatprep.subr.mxu0 0.0
        %1033 = vmatpush1.msra.mxu0 0.0
        %1034 = vmatprep.subr.mxu0 0.0
        %1035 = vmatpush1.msra.mxu0 0.0
        %1036 = vmatprep.subr.mxu0 0.0
        %1037 = vmatpush1.msra.mxu0 0.0
        %1038 = vmatprep.subr.mxu0 0.0
        %1039 = vmatpush1.msra.mxu0 0.0
        %1040 = vmatprep.subr.mxu0 0.0
        %1041 = vmatpush1.msra.mxu0 0.0
        %1042 = vmatprep.subr.mxu0 0.0
        %1043 = vmatpush1.msra.mxu0 0.0
        %1044 = vmatprep.subr.mxu0 0.0
        %1045 = vmatpush1.msra.mxu0 0.0
        %1046 = vmatprep.subr.mxu0 0.0
        %1047 = vmatpush1.msra.mxu0 0.0
        %1048 = vmatprep.subr.mxu0 0.0
        %1049 = vmatpush1.msra.mxu0 0.0
        %1050 = vmatprep.subr.mxu0 0.0
        %1051 = vmatpush1.msra.mxu0 0.0
        %1052 = vmatprep.subr.mxu0 0.0
        %1053 = vmatpush1.msra.mxu0 0.0
        %1054 = vmatprep.subr.mxu0 0.0
        %1055 = vmatpush1.msra.mxu0 0.0
        %1056 = vmatprep.mubr.f32.mxu0 0.0
        %1057 = vmatmul.mubr.f32.gmra.mrb[0].mxu0 %v990
        %v1058 = vpop.f32.mrb[0].mxu0
        %v1059 = vadd.f32 0.0, %v1058
        %v1060 = vpop.f32.mrb[0].mxu0
        %1061 = vdwg.mxu0
        %v1062 = vsel %vm824, %v1059, -inf
        %1063 = vmax.xlane.f32.xlu0 %v1062
        %v1064 = vpop.xlane.xlu0 %1063
        %v1065 = vsub.f32 %v1059, %v1064
        %v1066 = vmul.f32 %v1065, 1.442695
        %v1067 = vpow.pop %v1066
        %v1068 = vsel %vm824, %v1067, 0.0
        %1069 = vadd.xlane.f32.xlu0 %v1068
        %v1070 = vpop.xlane.xlu0 %1069
        %v1071 = vrcp.pop %v1070
        %v1072 = vmul.f32 %v1067, %v1071
        %s1073 = scalar_lea.vmem [#allocation3], 8
        %v1074 = vld [vmem:[%s1073] sm:$0xff]
        %v1076 = vsel %vm824, %v1072, 0
        %v1079 = vsel %vm824, %v1074, 0
        %1081 = vmatprep.subr.mxu0 0.0
        %1082 = vmatpush1.xpose.msra.mxu0 %v1079
        %1083 = vmatprep.subr.mxu0 0.0
        %1084 = vmatpush1.xpose.msra.mxu0 0.0
        %1085 = vmatprep.subr.mxu0 0.0
        %1086 = vmatpush1.xpose.msra.mxu0 0.0
        %1087 = vmatprep.subr.mxu0 0.0
        %1088 = vmatpush1.xpose.msra.mxu0 0.0
        %1089 = vmatprep.subr.mxu0 0.0
        %1090 = vmatpush1.xpose.msra.mxu0 0.0
        %1091 = vmatprep.subr.mxu0 0.0
        %1092 = vmatpush1.xpose.msra.mxu0 0.0
        %1093 = vmatprep.subr.mxu0 0.0
        %1094 = vmatpush1.xpose.msra.mxu0 0.0
        %1095 = vmatprep.subr.mxu0 0.0
        %1096 = vmatpush1.xpose.msra.mxu0 0.0
        %1097 = vmatprep.subr.mxu0 0.0
        %1098 = vmatpush1.xpose.msra.mxu0 0.0
        %1099 = vmatprep.subr.mxu0 0.0
        %1100 = vmatpush1.xpose.msra.mxu0 0.0
        %1101 = vmatprep.subr.mxu0 0.0
        %1102 = vmatpush1.xpose.msra.mxu0 0.0
        %1103 = vmatprep.subr.mxu0 0.0
        %1104 = vmatpush1.xpose.msra.mxu0 0.0
        %1105 = vmatprep.subr.mxu0 0.0
        %1106 = vmatpush1.xpose.msra.mxu0 0.0
        %1107 = vmatprep.subr.mxu0 0.0
        %1108 = vmatpush1.xpose.msra.mxu0 0.0
        %1109 = vmatprep.subr.mxu0 0.0
        %1110 = vmatpush1.xpose.msra.mxu0 0.0
        %1111 = vmatprep.subr.mxu0 0.0
        %1112 = vmatpush1.xpose.msra.mxu0 0.0
        %1113 = vmatprep.subr.mxu0 0.0
        %1114 = vmatpush1.xpose.msra.mxu0 0.0
        %1115 = vmatprep.subr.mxu0 0.0
        %1116 = vmatpush1.xpose.msra.mxu0 0.0
        %1117 = vmatprep.subr.mxu0 0.0
        %1118 = vmatpush1.xpose.msra.mxu0 0.0
        %1119 = vmatprep.subr.mxu0 0.0
        %1120 = vmatpush1.xpose.msra.mxu0 0.0
        %1121 = vmatprep.subr.mxu0 0.0
        %1122 = vmatpush1.xpose.msra.mxu0 0.0
        %1123 = vmatprep.subr.mxu0 0.0
        %1124 = vmatpush1.xpose.msra.mxu0 0.0
        %1125 = vmatprep.subr.mxu0 0.0
        %1126 = vmatpush1.xpose.msra.mxu0 0.0
        %1127 = vmatprep.subr.mxu0 0.0
        %1128 = vmatpush1.xpose.msra.mxu0 0.0
        %1129 = vmatprep.subr.mxu0 0.0
        %1130 = vmatpush1.xpose.msra.mxu0 0.0
        %1131 = vmatprep.subr.mxu0 0.0
        %1132 = vmatpush1.xpose.msra.mxu0 0.0
        %1133 = vmatprep.subr.mxu0 0.0
        %1134 = vmatpush1.xpose.msra.mxu0 0.0
        %1135 = vmatprep.subr.mxu0 0.0
        %1136 = vmatpush1.xpose.msra.mxu0 0.0
        %1137 = vmatprep.subr.mxu0 0.0
        %1138 = vmatpush1.xpose.msra.mxu0 0.0
        %1139 = vmatprep.subr.mxu0 0.0
        %1140 = vmatpush1.xpose.msra.mxu0 0.0
        %1141 = vmatprep.subr.mxu0 0.0
        %1142 = vmatpush1.xpose.msra.mxu0 0.0
        %1143 = vmatprep.subr.mxu0 0.0
        %1144 = vmatpush1.xpose.msra.mxu0 0.0
        %1145 = vmatprep.mubr.f32.mxu0 0.0
        %1146 = vmatmul.mubr.f32.gmra.mrb[0].mxu0 %v1076
        %v1147 = vpop.f32.mrb[0].mxu0
        %v1148 = vadd.f32 0.0, %v1147
        %v1149 = vpop.f32.mrb[0].mxu0
        %1150 = vdwg.mxu0
        %s1151 = scalar_lea.vmem [#allocation2], 16
        %v1152 = vld [vmem:[%s1151] sm:$0xff]
        %1153 = vrot.lane.b32.xlu0 %v820, 112
        %v1154 = vpop.permute.xlu0 %1153
        %v1155 = vsel %vm824, %v1154, 0
        %1157 = vmatprep.subr.mxu0 0.0
        %1158 = vmatpush1.msra.mxu0 %v1152
        %1159 = vmatprep.subr.mxu0 0.0
        %1160 = vmatpush1.msra.mxu0 0.0
        %1161 = vmatprep.subr.mxu0 0.0
        %1162 = vmatpush1.msra.mxu0 0.0
        %1163 = vmatprep.subr.mxu0 0.0
        %1164 = vmatpush1.msra.mxu0 0.0
        %1165 = vmatprep.subr.mxu0 0.0
        %1166 = vmatpush1.msra.mxu0 0.0
        %1167 = vmatprep.subr.mxu0 0.0
        %1168 = vmatpush1.msra.mxu0 0.0
        %1169 = vmatprep.subr.mxu0 0.0
        %1170 = vmatpush1.msra.mxu0 0.0
        %1171 = vmatprep.subr.mxu0 0.0
        %1172 = vmatpush1.msra.mxu0 0.0
        %1173 = vmatprep.subr.mxu0 0.0
        %1174 = vmatpush1.msra.mxu0 0.0
        %1175 = vmatprep.subr.mxu0 0.0
        %1176 = vmatpush1.msra.mxu0 0.0
        %1177 = vmatprep.subr.mxu0 0.0
        %1178 = vmatpush1.msra.mxu0 0.0
        %1179 = vmatprep.subr.mxu0 0.0
        %1180 = vmatpush1.msra.mxu0 0.0
        %1181 = vmatprep.subr.mxu0 0.0
        %1182 = vmatpush1.msra.mxu0 0.0
        %1183 = vmatprep.subr.mxu0 0.0
        %1184 = vmatpush1.msra.mxu0 0.0
        %1185 = vmatprep.subr.mxu0 0.0
        %1186 = vmatpush1.msra.mxu0 0.0
        %1187 = vmatprep.subr.mxu0 0.0
        %1188 = vmatpush1.msra.mxu0 0.0
        %1189 = vmatprep.subr.mxu0 0.0
        %1190 = vmatpush1.msra.mxu0 0.0
        %1191 = vmatprep.subr.mxu0 0.0
        %1192 = vmatpush1.msra.mxu0 0.0
        %1193 = vmatprep.subr.mxu0 0.0
        %1194 = vmatpush1.msra.mxu0 0.0
        %1195 = vmatprep.subr.mxu0 0.0
        %1196 = vmatpush1.msra.mxu0 0.0
        %1197 = vmatprep.subr.mxu0 0.0
        %1198 = vmatpush1.msra.mxu0 0.0
        %1199 = vmatprep.subr.mxu0 0.0
        %1200 = vmatpush1.msra.mxu0 0.0
        %1201 = vmatprep.subr.mxu0 0.0
        %1202 = vmatpush1.msra.mxu0 0.0
        %1203 = vmatprep.subr.mxu0 0.0
        %1204 = vmatpush1.msra.mxu0 0.0
        %1205 = vmatprep.subr.mxu0 0.0
        %1206 = vmatpush1.msra.mxu0 0.0
        %1207 = vmatprep.subr.mxu0 0.0
        %1208 = vmatpush1.msra.mxu0 0.0
        %1209 = vmatprep.subr.mxu0 0.0
        %1210 = vmatpush1.msra.mxu0 0.0
        %1211 = vmatprep.subr.mxu0 0.0
        %1212 = vmatpush1.msra.mxu0 0.0
        %1213 = vmatprep.subr.mxu0 0.0
        %1214 = vmatpush1.msra.mxu0 0.0
        %1215 = vmatprep.subr.mxu0 0.0
        %1216 = vmatpush1.msra.mxu0 0.0
        %1217 = vmatprep.subr.mxu0 0.0
        %1218 = vmatpush1.msra.mxu0 0.0
        %1219 = vmatprep.subr.mxu0 0.0
        %1220 = vmatpush1.msra.mxu0 0.0
        %1221 = vmatprep.mubr.f32.mxu0 0.0
        %1222 = vmatmul.mubr.f32.gmra.mrb[0].mxu0 %v1155
        %v1223 = vpop.f32.mrb[0].mxu0
        %v1224 = vadd.f32 0.0, %v1223
        %v1225 = vpop.f32.mrb[0].mxu0
        %1226 = vdwg.mxu0
        %v1227 = vsel %vm824, %v1224, -inf
        %1228 = vmax.xlane.f32.xlu0 %v1227
        %v1229 = vpop.xlane.xlu0 %1228
        %v1230 = vsub.f32 %v1224, %v1229
        %v1231 = vmul.f32 %v1230, 1.442695
        %v1232 = vpow.pop %v1231
        %v1233 = vsel %vm824, %v1232, 0.0
        %1234 = vadd.xlane.f32.xlu0 %v1233
        %v1235 = vpop.xlane.xlu0 %1234
        %v1236 = vrcp.pop %v1235
        %v1237 = vmul.f32 %v1232, %v1236
        %s1238 = scalar_lea.vmem [#allocation3], 16
        %v1239 = vld [vmem:[%s1238] sm:$0xff]
        %v1241 = vsel %vm824, %v1237, 0
        %v1244 = vsel %vm824, %v1239, 0
        %1246 = vmatprep.subr.mxu0 0.0
        %1247 = vmatpush1.xpose.msra.mxu0 %v1244
        %1248 = vmatprep.subr.mxu0 0.0
        %1249 = vmatpush1.xpose.msra.mxu0 0.0
        %1250 = vmatprep.subr.mxu0 0.0
        %1251 = vmatpush1.xpose.msra.mxu0 0.0
        %1252 = vmatprep.subr.mxu0 0.0
        %1253 = vmatpush1.xpose.msra.mxu0 0.0
        %1254 = vmatprep.subr.mxu0 0.0
        %1255 = vmatpush1.xpose.msra.mxu0 0.0
        %1256 = vmatprep.subr.mxu0 0.0
        %1257 = vmatpush1.xpose.msra.mxu0 0.0
        %1258 = vmatprep.subr.mxu0 0.0
        %1259 = vmatpush1.xpose.msra.mxu0 0.0
        %1260 = vmatprep.subr.mxu0 0.0
        %1261 = vmatpush1.xpose.msra.mxu0 0.0
        %1262 = vmatprep.subr.mxu0 0.0
        %1263 = vmatpush1.xpose.msra.mxu0 0.0
        %1264 = vmatprep.subr.mxu0 0.0
        %1265 = vmatpush1.xpose.msra.mxu0 0.0
        %1266 = vmatprep.subr.mxu0 0.0
        %1267 = vmatpush1.xpose.msra.mxu0 0.0
        %1268 = vmatprep.subr.mxu0 0.0
        %1269 = vmatpush1.xpose.msra.mxu0 0.0
        %1270 = vmatprep.subr.mxu0 0.0
        %1271 = vmatpush1.xpose.msra.mxu0 0.0
        %1272 = vmatprep.subr.mxu0 0.0
        %1273 = vmatpush1.xpose.msra.mxu0 0.0
        %1274 = vmatprep.subr.mxu0 0.0
        %1275 = vmatpush1.xpose.msra.mxu0 0.0
        %1276 = vmatprep.subr.mxu0 0.0
        %1277 = vmatpush1.xpose.msra.mxu0 0.0
        %1278 = vmatprep.subr.mxu0 0.0
        %1279 = vmatpush1.xpose.msra.mxu0 0.0
        %1280 = vmatprep.subr.mxu0 0.0
        %1281 = vmatpush1.xpose.msra.mxu0 0.0
        %1282 = vmatprep.subr.mxu0 0.0
        %1283 = vmatpush1.xpose.msra.mxu0 0.0
        %1284 = vmatprep.subr.mxu0 0.0
        %1285 = vmatpush1.xpose.msra.mxu0 0.0
        %1286 = vmatprep.subr.mxu0 0.0
        %1287 = vmatpush1.xpose.msra.mxu0 0.0
        %1288 = vmatprep.subr.mxu0 0.0
        %1289 = vmatpush1.xpose.msra.mxu0 0.0
        %1290 = vmatprep.subr.mxu0 0.0
        %1291 = vmatpush1.xpose.msra.mxu0 0.0
        %1292 = vmatprep.subr.mxu0 0.0
        %1293 = vmatpush1.xpose.msra.mxu0 0.0
        %1294 = vmatprep.subr.mxu0 0.0
        %1295 = vmatpush1.xpose.msra.mxu0 0.0
        %1296 = vmatprep.subr.mxu0 0.0
        %1297 = vmatpush1.xpose.msra.mxu0 0.0
        %1298 = vmatprep.subr.mxu0 0.0
        %1299 = vmatpush1.xpose.msra.mxu0 0.0
        %1300 = vmatprep.subr.mxu0 0.0
        %1301 = vmatpush1.xpose.msra.mxu0 0.0
        %1302 = vmatprep.subr.mxu0 0.0
        %1303 = vmatpush1.xpose.msra.mxu0 0.0
        %1304 = vmatprep.subr.mxu0 0.0
        %1305 = vmatpush1.xpose.msra.mxu0 0.0
        %1306 = vmatprep.subr.mxu0 0.0
        %1307 = vmatpush1.xpose.msra.mxu0 0.0
        %1308 = vmatprep.subr.mxu0 0.0
        %1309 = vmatpush1.xpose.msra.mxu0 0.0
        %1310 = vmatprep.mubr.f32.mxu0 0.0
        %1311 = vmatmul.mubr.f32.gmra.mrb[0].mxu0 %v1241
        %v1312 = vpop.f32.mrb[0].mxu0
        %v1313 = vadd.f32 0.0, %v1312
        %v1314 = vpop.f32.mrb[0].mxu0
        %1315 = vdwg.mxu0
        %s1316 = scalar_lea.vmem [#allocation2], 24
        %v1317 = vld [vmem:[%s1316] sm:$0xff]
        %1318 = vrot.lane.b32.xlu0 %v820, 104
        %v1319 = vpop.permute.xlu0 %1318
        %v1320 = vsel %vm824, %v1319, 0
        %1322 = vmatprep.subr.mxu0 0.0
        %1323 = vmatpush1.msra.mxu0 %v1317
        %1324 = vmatprep.subr.mxu0 0.0
        %1325 = vmatpush1.msra.mxu0 0.0
        %1326 = vmatprep.subr.mxu0 0.0
        %1327 = vmatpush1.msra.mxu0 0.0
        %1328 = vmatprep.subr.mxu0 0.0
        %1329 = vmatpush1.msra.mxu0 0.0
        %1330 = vmatprep.subr.mxu0 0.0
        %1331 = vmatpush1.msra.mxu0 0.0
        %1332 = vmatprep.subr.mxu0 0.0
        %1333 = vmatpush1.msra.mxu0 0.0
        %1334 = vmatprep.subr.mxu0 0.0
        %1335 = vmatpush1.msra.mxu0 0.0
        %1336 = vmatprep.subr.mxu0 0.0
        %1337 = vmatpush1.msra.mxu0 0.0
        %1338 = vmatprep.subr.mxu0 0.0
        %1339 = vmatpush1.msra.mxu0 0.0
        %1340 = vmatprep.subr.mxu0 0.0
        %1341 = vmatpush1.msra.mxu0 0.0
        %1342 = vmatprep.subr.mxu0 0.0
        %1343 = vmatpush1.msra.mxu0 0.0
        %1344 = vmatprep.subr.mxu0 0.0
        %1345 = vmatpush1.msra.mxu0 0.0
        %1346 = vmatprep.subr.mxu0 0.0
        %1347 = vmatpush1.msra.mxu0 0.0
        %1348 = vmatprep.subr.mxu0 0.0
        %1349 = vmatpush1.msra.mxu0 0.0
        %1350 = vmatprep.subr.mxu0 0.0
        %1351 = vmatpush1.msra.mxu0 0.0
        %1352 = vmatprep.subr.mxu0 0.0
        %1353 = vmatpush1.msra.mxu0 0.0
        %1354 = vmatprep.subr.mxu0 0.0
        %1355 = vmatpush1.msra.mxu0 0.0
        %1356 = vmatprep.subr.mxu0 0.0
        %1357 = vmatpush1.msra.mxu0 0.0
        %1358 = vmatprep.subr.mxu0 0.0
        %1359 = vmatpush1.msra.mxu0 0.0
        %1360 = vmatprep.subr.mxu0 0.0
        %1361 = vmatpush1.msra.mxu0 0.0
        %1362 = vmatprep.subr.mxu0 0.0
        %1363 = vmatpush1.msra.mxu0 0.0
        %1364 = vmatprep.subr.mxu0 0.0
        %1365 = vmatpush1.msra.mxu0 0.0
        %1366 = vmatprep.subr.mxu0 0.0
        %1367 = vmatpush1.msra.mxu0 0.0
        %1368 = vmatprep.subr.mxu0 0.0
        %1369 = vmatpush1.msra.mxu0 0.0
        %1370 = vmatprep.subr.mxu0 0.0
        %1371 = vmatpush1.msra.mxu0 0.0
        %1372 = vmatprep.subr.mxu0 0.0
        %1373 = vmatpush1.msra.mxu0 0.0
        %1374 = vmatprep.subr.mxu0 0.0
        %1375 = vmatpush1.msra.mxu0 0.0
        %1376 = vmatprep.subr.mxu0 0.0
        %1377 = vmatpush1.msra.mxu0 0.0
        %1378 = vmatprep.subr.mxu0 0.0
        %1379 = vmatpush1.msra.mxu0 0.0
        %1380 = vmatprep.subr.mxu0 0.0
        %1381 = vmatpush1.msra.mxu0 0.0
        %1382 = vmatprep.subr.mxu0 0.0
        %1383 = vmatpush1.msra.mxu0 0.0
        %1384 = vmatprep.subr.mxu0 0.0
        %1385 = vmatpush1.msra.mxu0 0.0
        %1386 = vmatprep.mubr.f32.mxu0 0.0
        %1387 = vmatmul.mubr.f32.gmra.mrb[0].mxu0 %v1320
        %v1388 = vpop.f32.mrb[0].mxu0
        %v1389 = vadd.f32 0.0, %v1388
        %v1390 = vpop.f32.mrb[0].mxu0
        %1391 = vdwg.mxu0
        %v1392 = vsel %vm824, %v1389, -inf
        %1393 = vmax.xlane.f32.xlu0 %v1392
        %v1394 = vpop.xlane.xlu0 %1393
        %v1395 = vsub.f32 %v1389, %v1394
        %v1396 = vmul.f32 %v1395, 1.442695
        %v1397 = vpow.pop %v1396
        %v1398 = vsel %vm824, %v1397, 0.0
        %1399 = vadd.xlane.f32.xlu0 %v1398
        %v1400 = vpop.xlane.xlu0 %1399
        %v1401 = vrcp.pop %v1400
        %v1402 = vmul.f32 %v1397, %v1401
        %s1403 = scalar_lea.vmem [#allocation3], 24
        %v1404 = vld [vmem:[%s1403] sm:$0xff]
        %v1406 = vsel %vm824, %v1402, 0
        %v1409 = vsel %vm824, %v1404, 0
        %1411 = vmatprep.subr.mxu0 0.0
        %1412 = vmatpush1.xpose.msra.mxu0 %v1409
        %1413 = vmatprep.subr.mxu0 0.0
        %1414 = vmatpush1.xpose.msra.mxu0 0.0
        %1415 = vmatprep.subr.mxu0 0.0
        %1416 = vmatpush1.xpose.msra.mxu0 0.0
        %1417 = vmatprep.subr.mxu0 0.0
        %1418 = vmatpush1.xpose.msra.mxu0 0.0
        %1419 = vmatprep.subr.mxu0 0.0
        %1420 = vmatpush1.xpose.msra.mxu0 0.0
        %1421 = vmatprep.subr.mxu0 0.0
        %1422 = vmatpush1.xpose.msra.mxu0 0.0
        %1423 = vmatprep.subr.mxu0 0.0
        %1424 = vmatpush1.xpose.msra.mxu0 0.0
        %1425 = vmatprep.subr.mxu0 0.0
        %1426 = vmatpush1.xpose.msra.mxu0 0.0
        %1427 = vmatprep.subr.mxu0 0.0
        %1428 = vmatpush1.xpose.msra.mxu0 0.0
        %1429 = vmatprep.subr.mxu0 0.0
        %1430 = vmatpush1.xpose.msra.mxu0 0.0
        %1431 = vmatprep.subr.mxu0 0.0
        %1432 = vmatpush1.xpose.msra.mxu0 0.0
        %1433 = vmatprep.subr.mxu0 0.0
        %1434 = vmatpush1.xpose.msra.mxu0 0.0
        %1435 = vmatprep.subr.mxu0 0.0
        %1436 = vmatpush1.xpose.msra.mxu0 0.0
        %1437 = vmatprep.subr.mxu0 0.0
        %1438 = vmatpush1.xpose.msra.mxu0 0.0
        %1439 = vmatprep.subr.mxu0 0.0
        %1440 = vmatpush1.xpose.msra.mxu0 0.0
        %1441 = vmatprep.subr.mxu0 0.0
        %1442 = vmatpush1.xpose.msra.mxu0 0.0
        %1443 = vmatprep.subr.mxu0 0.0
        %1444 = vmatpush1.xpose.msra.mxu0 0.0
        %1445 = vmatprep.subr.mxu0 0.0
        %1446 = vmatpush1.xpose.msra.mxu0 0.0
        %1447 = vmatprep.subr.mxu0 0.0
        %1448 = vmatpush1.xpose.msra.mxu0 0.0
        %1449 = vmatprep.subr.mxu0 0.0
        %1450 = vmatpush1.xpose.msra.mxu0 0.0
        %1451 = vmatprep.subr.mxu0 0.0
        %1452 = vmatpush1.xpose.msra.mxu0 0.0
        %1453 = vmatprep.subr.mxu0 0.0
        %1454 = vmatpush1.xpose.msra.mxu0 0.0
        %1455 = vmatprep.subr.mxu0 0.0
        %1456 = vmatpush1.xpose.msra.mxu0 0.0
        %1457 = vmatprep.subr.mxu0 0.0
        %1458 = vmatpush1.xpose.msra.mxu0 0.0
        %1459 = vmatprep.subr.mxu0 0.0
        %1460 = vmatpush1.xpose.msra.mxu0 0.0
        %1461 = vmatprep.subr.mxu0 0.0
        %1462 = vmatpush1.xpose.msra.mxu0 0.0
        %1463 = vmatprep.subr.mxu0 0.0
        %1464 = vmatpush1.xpose.msra.mxu0 0.0
        %1465 = vmatprep.subr.mxu0 0.0
        %1466 = vmatpush1.xpose.msra.mxu0 0.0
        %1467 = vmatprep.subr.mxu0 0.0
        %1468 = vmatpush1.xpose.msra.mxu0 0.0
        %1469 = vmatprep.subr.mxu0 0.0
        %1470 = vmatpush1.xpose.msra.mxu0 0.0
        %1471 = vmatprep.subr.mxu0 0.0
        %1472 = vmatpush1.xpose.msra.mxu0 0.0
        %1473 = vmatprep.subr.mxu0 0.0
        %1474 = vmatpush1.xpose.msra.mxu0 0.0
        %1475 = vmatprep.mubr.f32.mxu0 0.0
        %1476 = vmatmul.mubr.f32.gmra.mrb[0].mxu0 %v1406
        %v1477 = vpop.f32.mrb[0].mxu0
        %v1478 = vadd.f32 0.0, %v1477
        %v1479 = vpop.f32.mrb[0].mxu0
        %1480 = vdwg.mxu0
        %1482 = vrot.lane.b32.xlu0 %v1148, 8
        %v1483 = vpop.permute.xlu0 %1482
        %1486 = vrot.lane.b32.xlu0 %v1313, 16
        %v1487 = vpop.permute.xlu0 %1486
        %1490 = vrot.lane.b32.xlu0 %v1478, 24
        %v1491 = vpop.permute.xlu0 %1490
        %v1493 = vsel %vm824, %v983, %v1483
        %vm1494 = vcmask 130048
        %v1495 = vsel %vm1494, %v1493, %v1487
        %vm1496 = vcmask 195584
        %v1497 = vsel %vm1496, %v1495, %v1491
        %v1498 = vld [vmem:[#allocation10] sm:$0xff]
        %v1499 = vld [vmem:[#allocation10 + $0x8] sm:$0xff]
        %v1500 = vld [vmem:[#allocation10 + $0x10] sm:$0xff]
        %v1501 = vld [vmem:[#allocation10 + $0x18] sm:$0xff]
        %v1502 = vld [vmem:[%s6] sm:$0x1]
        %v1504 = vlaneseq
        %v1505 = vshrl.u32 %v1504, 7
        %v1506 = vsub.s32 0, %v1505
        %v1507 = vrot.slane %v1502, %v1506
        %v1510 = vsel %vm749, %v1497, 0
        %1512 = vmatprep.subr.mxu0 0.0
        %1513 = vmatpush1.msra.mxu0 %v1498
        %1514 = vmatprep.subr.mxu0 0.0
        %1515 = vmatpush1.msra.mxu0 %v1499
        %1516 = vmatprep.subr.mxu0 0.0
        %1517 = vmatpush1.msra.mxu0 %v1500
        %1518 = vmatprep.subr.mxu0 0.0
        %1519 = vmatpush1.msra.mxu0 %v1501
        %1520 = vmatprep.subr.mxu0 0.0
        %1521 = vmatpush1.msra.mxu0 0.0
        %1522 = vmatprep.subr.mxu0 0.0
        %1523 = vmatpush1.msra.mxu0 0.0
        %1524 = vmatprep.subr.mxu0 0.0
        %1525 = vmatpush1.msra.mxu0 0.0
        %1526 = vmatprep.subr.mxu0 0.0
        %1527 = vmatpush1.msra.mxu0 0.0
        %1528 = vmatprep.subr.mxu0 0.0
        %1529 = vmatpush1.msra.mxu0 0.0
        %1530 = vmatprep.subr.mxu0 0.0
        %1531 = vmatpush1.msra.mxu0 0.0
        %1532 = vmatprep.subr.mxu0 0.0
        %1533 = vmatpush1.msra.mxu0 0.0
        %1534 = vmatprep.subr.mxu0 0.0
        %1535 = vmatpush1.msra.mxu0 0.0
        %1536 = vmatprep.subr.mxu0 0.0
        %1537 = vmatpush1.msra.mxu0 0.0
        %1538 = vmatprep.subr.mxu0 0.0
        %1539 = vmatpush1.msra.mxu0 0.0
        %1540 = vmatprep.subr.mxu0 0.0
        %1541 = vmatpush1.msra.mxu0 0.0
        %1542 = vmatprep.subr.mxu0 0.0
        %1543 = vmatpush1.msra.mxu0 0.0
        %1544 = vmatprep.subr.mxu0 0.0
        %1545 = vmatpush1.msra.mxu0 0.0
        %1546 = vmatprep.subr.mxu0 0.0
        %1547 = vmatpush1.msra.mxu0 0.0
        %1548 = vmatprep.subr.mxu0 0.0
        %1549 = vmatpush1.msra.mxu0 0.0
        %1550 = vmatprep.subr.mxu0 0.0
        %1551 = vmatpush1.msra.mxu0 0.0
        %1552 = vmatprep.subr.mxu0 0.0
        %1553 = vmatpush1.msra.mxu0 0.0
        %1554 = vmatprep.subr.mxu0 0.0
        %1555 = vmatpush1.msra.mxu0 0.0
        %1556 = vmatprep.subr.mxu0 0.0
        %1557 = vmatpush1.msra.mxu0 0.0
        %1558 = vmatprep.subr.mxu0 0.0
        %1559 = vmatpush1.msra.mxu0 0.0
        %1560 = vmatprep.subr.mxu0 0.0
        %1561 = vmatpush1.msra.mxu0 0.0
        %1562 = vmatprep.subr.mxu0 0.0
        %1563 = vmatpush1.msra.mxu0 0.0
        %1564 = vmatprep.subr.mxu0 0.0
        %1565 = vmatpush1.msra.mxu0 0.0
        %1566 = vmatprep.subr.mxu0 0.0
        %1567 = vmatpush1.msra.mxu0 0.0
        %1568 = vmatprep.subr.mxu0 0.0
        %1569 = vmatpush1.msra.mxu0 0.0
        %1570 = vmatprep.subr.mxu0 0.0
        %1571 = vmatpush1.msra.mxu0 0.0
        %1572 = vmatprep.subr.mxu0 0.0
        %1573 = vmatpush1.msra.mxu0 0.0
        %1574 = vmatprep.subr.mxu0 0.0
        %1575 = vmatpush1.msra.mxu0 0.0
        %1576 = vmatprep.mubr.f32.mxu0 0.0
        %1577 = vmatmul.mubr.f32.gmra.mrb[0].mxu0 %v1510
        %v1578 = vpop.f32.mrb[0].mxu0
        %v1579 = vadd.f32 %v1507, %v1578
        %v1580 = vpop.f32.mrb[0].mxu0
        %1581 = vdwg.mxu0
        %1582 = vst.msk [vmem:[%s351] sm:$0xff] %vm749, %v1579
        %s1583 = sand.u32 %s200, 1
        %s1584 = scalar_lea.sflag [#allocation6], %s1583
        %s1585 = sand.u32 %s200, 1
        %s1586 = smul.addr %s1585, 8
        %s1587 = scalar_lea.vmem [#allocation12], %s1586
        // Predicated region
        $region69: #{tpu_custom_call.1} parent=47 // pred_check
          %p1588 = pneg %p210
        $region70: #{tpu_custom_call.1} parent=47 // pred_check_branch
          %1590 = sbr.rel (%p1588) target = $region72
        $region71: #{tpu_custom_call.1} parent=47 // pred_region
          %s1592 = ssub.s32 128, 128
          %1593 = vsyncadd %s1584, %s1592
          %s1594 = sadd.s32 %s31, %s30
          %s1595 = smul.addr %s1594, 128
          %s1596 = scalar_lea.hbm %s7, %s1595
          %s1598 = sshll.u32 %s1587, 4
          %s1599 = int_to_ptr.vmem [resolvable:$true] %s1598
          %1601 = dma.vmem_to_hbm [thread:$0]  %s1599, 128, %s1596, %s1584
        $region72: #{tpu_custom_call.1} parent=47 // pred_fallthru
          _
      $region48: #{tpu_custom_call.1} parent=5 // pred_fallthru
        _
      %p1602 = scmp.le.s32.totalorder 2, %s21
      // Predicated region
      $region73: #{tpu_custom_call.1} parent=5 // pred_check
        %p1603 = pneg %p1602
      $region74: #{tpu_custom_call.1} parent=5 // pred_check_branch
        %1605 = sbr.rel (%p1603) target = $region76
      $region75: #{tpu_custom_call.1} parent=5 // pred_region
        %s1606 = ssub.s32 %s21, 2
        // Predicated region
        $region77: #{tpu_custom_call.1} parent=75 // pred_check
          %p1607 = pneg %p216
        $region78: #{tpu_custom_call.1} parent=75 // pred_check_branch
          %1609 = sbr.rel (%p1607) target = $region80
        $region79: #{tpu_custom_call.1} parent=75 // pred_region
          %s1610 = sand.u32 %s201, 1
          %s1611 = scalar_lea.sflag [#allocation6], %s1610
          %s1612 = sand.u32 %s201, 1
          %s1613 = smul.addr %s1612, 8
          %s1614 = scalar_lea.vmem [#allocation12], %s1613
          %1615 = dma.done %s1611, 128
        $region80: #{tpu_custom_call.1} parent=75 // pred_fallthru
          _
      $region76: #{tpu_custom_call.1} parent=5 // pred_fallthru
        _
    $region6: #{tpu_custom_call.1} parent=1 // loop_footer
      %s25 = sadd.s32 1, %s21
    $region7: #{tpu_custom_call.1} parent=1 // loop_footer_branch
      %20 = sbr.rel target = $region3
    $region8: #{tpu_custom_call.1} parent=1 // loop_exit
      _
    %1616 = vsyncpa [#allocation5], 1
    %s1617 = scalar_lea.sflag [#allocation5], 1
    %1618 = vsyncpa %s1617, 1
    %1619 = vsyncpa [#allocation8], 1
    %1620 = vsyncpa [#allocation11], 1
    %1621 = vsyncpa [#allocation6], 1
    %s1622 = scalar_lea.sflag [#allocation6], 1
    %1623 = vsyncpa %s1622, 1

</llo_original>
